<compile_context>
chip_gen: v7x
topology: tpu7x:2x2x1
jax: 0.10.0
libtpu: 0.0.40
codegen_flags: <defaults>
</compile_context>

<pallas_src>
import math
import functools

import jax
import jax.numpy as jnp
from jax import lax
from jax.experimental import pallas as pl
from jax.experimental.pallas import tpu as pltpu


# ----------------------------- kernel helpers -------------------------------

def _layer_norm(x, w, b, eps=1e-5):
    mu = jnp.mean(x, axis=-1, keepdims=True)
    var = jnp.mean((x - mu) ** 2, axis=-1, keepdims=True)
    return (x - mu) * lax.rsqrt(var + eps) * w + b


def _gelu_exact(x):
    # PyTorch nn.GELU() default is the exact erf-based formulation.
    return 0.5 * x * (1.0 + lax.erf(x * (1.0 / math.sqrt(2.0))))


# --------------------------------- kernel -----------------------------------

def cross_attn_kernel(t_ref, v_ref,
                      wq_ref, wk_ref, wv_ref, bq_ref, bk_ref, bv_ref,
                      wo_ref, bo_ref,
                      ln1w_ref, ln1b_ref, ln2w_ref, ln2b_ref,
                      w1_ref, b1_ref, w2_ref, b2_ref,
                      out_ref, attn_scr, *, num_heads, b_blk, tq, tk):
    f32, bf16 = jnp.float32, jnp.bfloat16
    t_bf = t_ref[...]                    # (b_blk*tq, E) bf16 query rows
    v_bf = v_ref[...]                    # (b_blk*tk, E) bf16 key/value rows
    E = t_bf.shape[-1]
    hd = E // num_heads
    scale = 1.0 / math.sqrt(hd)

    # Fused QKV projections on all rows of the batch block: bf16 MXU inputs,
    # f32 accumulation; bias add + query scaling in f32.
    q = (jnp.dot(t_bf, wq_ref[...], preferred_element_type=f32) + bq_ref[...]) * scale
    k = jnp.dot(v_bf, wk_ref[...], preferred_element_type=f32) + bk_ref[...]
    val = jnp.dot(v_bf, wv_ref[...], preferred_element_type=f32) + bv_ref[...]

    # Contract last dims of q and k (q @ k^T) without materializing a transpose.
    dn_qkt = (((1,), (1,)), ((), ()))

    for bi in range(b_blk):              # static loop over batch rows in this block
        qsl = slice(bi * tq, (bi + 1) * tq)      # 8-aligned sublane slices
        ksl = slice(bi * tk, (bi + 1) * tk)
        attn_b = None
        for h in range(num_heads):       # static loop over heads
            hsl = slice(h * hd, (h + 1) * hd)
            qh = q[qsl, hsl].astype(bf16)         # (tq, hd)
            kh = k[ksl, hsl].astype(bf16)         # (tk, hd)
            vh = val[ksl, hsl].astype(bf16)       # (tk, hd)

            s = lax.dot_general(qh, kh, dn_qkt,
                                preferred_element_type=f32)      # (tq, tk) f32
            s = s - jnp.max(s, axis=-1, keepdims=True)
            p = jnp.exp(s)                                       # unnormalized probs
            denom = jnp.sum(p, axis=-1, keepdims=True)           # (tq, 1)

            o_h = jnp.dot(p.astype(bf16), vh,
                          preferred_element_type=f32)            # (tq, hd) f32
            # Deferred softmax normalization on the small (tq, hd) tile (EUP recip).
            o_h = o_h * pl.reciprocal(denom, approx=True)

            # Fold this head's slice of the output projection; no concatenate.
            contrib = jnp.dot(o_h.astype(bf16), wo_ref[h],
                              preferred_element_type=f32)        # (tq, E) f32
            attn_b = contrib if attn_b is None else attn_b + contrib
        attn_scr[qsl, :] = attn_b

    # residual + LayerNorm1 (f32)
    x = _layer_norm(t_bf.astype(f32) + attn_scr[...] + bo_ref[...],
                    ln1w_ref[...], ln1b_ref[...])

    # MLP: Linear(E, 4E) -> exact GELU -> Linear(4E, E); bf16 MXU, f32 elementwise.
    h1 = jnp.dot(x.astype(bf16), w1_ref[...], preferred_element_type=f32) + b1_ref[...]
    h1 = _gelu_exact(h1)
    h2 = jnp.dot(h1.astype(bf16), w2_ref[...], preferred_element_type=f32) + b2_ref[...]

    # residual + LayerNorm2, store in the (narrow) output dtype.
    out_ref[...] = _layer_norm(x + h2, ln2w_ref[...], ln2b_ref[...]).astype(out_ref.dtype)


# -------------------------------- wrapper -----------------------------------

def prepare_params(params, num_heads):
    """One-time (hoisted) weight layout/dtype prep: transpose for right-multiply,
    cast to bf16, split Wo per head, keep biases/LN params as f32 rows."""
    bf16, f32 = jnp.bfloat16, jnp.float32
    E = params["wq"].shape[0]
    hd = E // num_heads

    def row(x):
        return x.reshape(1, -1).astype(f32)

    return {
        "wq": params["wq"].T.astype(bf16),
        "wk": params["wk"].T.astype(bf16),
        "wv": params["wv"].T.astype(bf16),
        "bq": row(params["bq"]), "bk": row(params["bk"]), "bv": row(params["bv"]),
        # Wo^T has rows indexed by (head, head_dim); split to (H, hd, E) so the
        # kernel can fold the projection per head with a plain 2-D dot.
        "wo": params["wo"].T.reshape(num_heads, hd, E).astype(bf16),
        "bo": row(params["bo"]),
        "ln1_w": row(params["ln1_w"]), "ln1_b": row(params["ln1_b"]),
        "ln2_w": row(params["ln2_w"]), "ln2_b": row(params["ln2_b"]),
        "w1": params["w1"].T.astype(bf16), "b1": row(params["b1"]),
        "w2": params["w2"].T.astype(bf16), "b2": row(params["b2"]),
    }


def cross_attention_block(t, v, prepared, num_heads, batch_block=None):
    """t: (B, Tq, E) fp16, v: (B, Tk, E) fp16. Returns (B, Tq, E) fp16.

    batch_block: batch rows per grid step. Default = B (single grid step; best on
    single-TC v5e/v6e). On v7x set batch_block = B // 2 so the parallel batch
    axis maps onto the two TensorCores.
    """
    B, Tq, E = t.shape
    _, Tk, _ = v.shape
    assert E % num_heads == 0
    bblk = B if batch_block is None else batch_block
    assert B % bblk == 0
    bf16 = jnp.bfloat16

    # Flatten batch into the row (sublane) dim -> tall dense tiles for the MXU
    # and for vector stores; Tq/Tk are multiples of 8 so this is tile-aligned.
    t2 = t.reshape(B * Tq, E).astype(bf16)
    v2 = v.reshape(B * Tk, E).astype(bf16)

    p = prepared
    args = (t2, v2,
            p["wq"], p["wk"], p["wv"], p["bq"], p["bk"], p["bv"],
            p["wo"], p["bo"],
            p["ln1_w"], p["ln1_b"], p["ln2_w"], p["ln2_b"],
            p["w1"], p["b1"], p["w2"], p["b2"])

    def const_spec(shape):
        nd = len(shape)
        return pl.BlockSpec(shape, lambda i, _nd=nd: (0,) * _nd)

    in_specs = [
        pl.BlockSpec((bblk * Tq, E), lambda i: (i, 0)),   # t rows for this block
        pl.BlockSpec((bblk * Tk, E), lambda i: (i, 0)),   # v rows for this block
    ] + [const_spec(a.shape) for a in args[2:]]

    out = pl.pallas_call(
        functools.partial(cross_attn_kernel, num_heads=num_heads,
                          b_blk=bblk, tq=Tq, tk=Tk),
        out_shape=jax.ShapeDtypeStruct((B * Tq, E), bf16),
        grid_spec=pltpu.PrefetchScalarGridSpec(
            num_scalar_prefetch=0,
            grid=(B // bblk,),
            in_specs=in_specs,
            out_specs=pl.BlockSpec((bblk * Tq, E), lambda i: (i, 0)),
            scratch_shapes=[pltpu.VMEM((bblk * Tq, E), jnp.float32)],
        ),
        compiler_params=pltpu.CompilerParams(
            dimension_semantics=("parallel",)),
    )(*args)
    # Module parameters/IO are fp16; single cheap narrow->narrow cast at the end.
    return out.reshape(B, Tq, E).astype(jnp.float16)


# ----------------------- pure-JAX reference (for check) ---------------------

def reference(t, v, params, num_heads):
    f32 = jnp.float32
    p = {k: a.astype(f32) for k, a in params.items()}
    t, v = t.astype(f32), v.astype(f32)
    B, Tq, E = t.shape
    Tk = v.shape[1]
    hd = E // num_heads
    q = t @ p["wq"].T + p["bq"]
    k = v @ p["wk"].T + p["bk"]
    val = v @ p["wv"].T + p["bv"]
    q = q.reshape(B, Tq, num_heads, hd).transpose(0, 2, 1, 3)
    k = k.reshape(B, Tk, num_heads, hd).transpose(0, 2, 1, 3)
    val = val.reshape(B, Tk, num_heads, hd).transpose(0, 2, 1, 3)
    s = jnp.einsum("bhqd,bhkd->bhqk", q, k) / math.sqrt(hd)
    a = jax.nn.softmax(s, axis=-1)
    o = jnp.einsum("bhqk,bhkd->bhqd", a, val).transpose(0, 2, 1, 3).reshape(B, Tq, E)
    o = o @ p["wo"].T + p["bo"]

    def ln(x, w, b):
        mu = x.mean(-1, keepdims=True)
        var = ((x - mu) ** 2).mean(-1, keepdims=True)
        return (x - mu) * lax.rsqrt(var + 1e-5) * w + b

    x = ln(t + o, p["ln1_w"], p["ln1_b"])
    h = jax.nn.gelu(x @ p["w1"].T + p["b1"], approximate=False)
    h = h @ p["w2"].T + p["b2"]
    return ln(x + h, p["ln2_w"], p["ln2_b"]).astype(jnp.float16)


# ---------------------------------- main -------------------------------------

if __name__ == "__main__":
    embed_dim, num_heads = 32, 4
    B, Tq, Tk = 2, 8, 16
    f16 = jnp.float16

    key = jax.random.PRNGKey(0)
    keys = jax.random.split(key, 16)

    def rnd(k, shape, scale=0.1):
        return (jax.random.normal(k, shape, dtype=jnp.float32) * scale).astype(f16)

    params = {
        "wq": rnd(keys[0], (embed_dim, embed_dim)),
        "wk": rnd(keys[1], (embed_dim, embed_dim)),
        "wv": rnd(keys[2], (embed_dim, embed_dim)),
        "bq": rnd(keys[3], (embed_dim,)),
        "bk": rnd(keys[4], (embed_dim,)),
        "bv": rnd(keys[5], (embed_dim,)),
        "wo": rnd(keys[6], (embed_dim, embed_dim)),
        "bo": rnd(keys[7], (embed_dim,)),
        "ln1_w": jnp.ones((embed_dim,), f16),
        "ln1_b": jnp.zeros((embed_dim,), f16),
        "ln2_w": jnp.ones((embed_dim,), f16),
        "ln2_b": jnp.zeros((embed_dim,), f16),
        "w1": rnd(keys[8], (4 * embed_dim, embed_dim)),
        "b1": rnd(keys[9], (4 * embed_dim,)),
        "w2": rnd(keys[10], (embed_dim, 4 * embed_dim)),
        "b2": rnd(keys[11], (embed_dim,)),
    }

    t = rnd(keys[12], (B, Tq, embed_dim), scale=1.0)
    v = rnd(keys[13], (B, Tk, embed_dim), scale=1.0)

    prepared = prepare_params(params, num_heads)          # hoisted, one-time prep
    out = cross_attention_block(t, v, prepared, num_heads)
    out = jax.block_until_ready(out)

    ref = reference(t, v, params, num_heads)
    assert out.shape == (B, Tq, embed_dim) and out.dtype == jnp.float16
    # Kernel uses bf16 matmul inputs (f32 accumulation) vs. the f32 reference,
    # so allow a slightly looser tolerance than a pure-f32 comparison.
    err = jnp.max(jnp.abs(out.astype(jnp.float32) - ref.astype(jnp.float32)))
    assert jnp.allclose(out.astype(jnp.float32), ref.astype(jnp.float32),
                        atol=3e-2, rtol=3e-2), f"max abs err {err}"

    print("KERNEL_OK")
</pallas_src>

<mosaic_0001>
module attributes {stable_mosaic.version = 11 : i64} {
  func.func @cross_attn_kernel(%arg0: i32, %arg1: memref<16x32xbf16, #tpu.memory_space<vmem>>, %arg2: memref<32x32xbf16, #tpu.memory_space<vmem>>, %arg3: memref<32x32xbf16, #tpu.memory_space<vmem>>, %arg4: memref<32x32xbf16, #tpu.memory_space<vmem>>, %arg5: memref<32x32xbf16, #tpu.memory_space<vmem>>, %arg6: memref<1x32xf32, #tpu.memory_space<vmem>>, %arg7: memref<1x32xf32, #tpu.memory_space<vmem>>, %arg8: memref<1x32xf32, #tpu.memory_space<vmem>>, %arg9: memref<4x8x32xbf16, #tpu.memory_space<vmem>>, %arg10: memref<1x32xf32, #tpu.memory_space<vmem>>, %arg11: memref<1x32xf32, #tpu.memory_space<vmem>>, %arg12: memref<1x32xf32, #tpu.memory_space<vmem>>, %arg13: memref<1x32xf32, #tpu.memory_space<vmem>>, %arg14: memref<1x32xf32, #tpu.memory_space<vmem>>, %arg15: memref<32x128xbf16, #tpu.memory_space<vmem>>, %arg16: memref<1x128xf32, #tpu.memory_space<vmem>>, %arg17: memref<128x32xbf16, #tpu.memory_space<vmem>>, %arg18: memref<1x32xf32, #tpu.memory_space<vmem>>, %arg19: memref<16x32xbf16, #tpu.memory_space<vmem>>, %arg20: memref<16x32xf32, #tpu.memory_space<vmem>>) attributes {dimension_semantics = [#tpu.dimension_semantics<parallel>], iteration_bounds = array<i64: 1>, scalar_prefetch = 0 : i64, scratch_operands = 1 : i64, tpu.core_type = #tpu.core_type<tc>, window_params = [{transform_indices = @transform_0, window_bounds = array<i64: 16, 32>}, {transform_indices = @transform_1, window_bounds = array<i64: 32, 32>}, {pipeline_mode = #tpu.pipeline_mode<synchronous>, transform_indices = @transform_2, window_bounds = array<i64: 32, 32>}, {pipeline_mode = #tpu.pipeline_mode<synchronous>, transform_indices = @transform_3, window_bounds = array<i64: 32, 32>}, {pipeline_mode = #tpu.pipeline_mode<synchronous>, transform_indices = @transform_4, window_bounds = array<i64: 32, 32>}, {pipeline_mode = #tpu.pipeline_mode<synchronous>, transform_indices = @transform_5, window_bounds = array<i64: 1, 32>}, {pipeline_mode = #tpu.pipeline_mode<synchronous>, transform_indices = @transform_6, window_bounds = array<i64: 1, 32>}, {pipeline_mode = #tpu.pipeline_mode<synchronous>, transform_indices = @transform_7, window_bounds = array<i64: 1, 32>}, {pipeline_mode = #tpu.pipeline_mode<synchronous>, transform_indices = @transform_8, window_bounds = array<i64: 4, 8, 32>}, {pipeline_mode = #tpu.pipeline_mode<synchronous>, transform_indices = @transform_9, window_bounds = array<i64: 1, 32>}, {pipeline_mode = #tpu.pipeline_mode<synchronous>, transform_indices = @transform_10, window_bounds = array<i64: 1, 32>}, {pipeline_mode = #tpu.pipeline_mode<synchronous>, transform_indices = @transform_11, window_bounds = array<i64: 1, 32>}, {pipeline_mode = #tpu.pipeline_mode<synchronous>, transform_indices = @transform_12, window_bounds = array<i64: 1, 32>}, {pipeline_mode = #tpu.pipeline_mode<synchronous>, transform_indices = @transform_13, window_bounds = array<i64: 1, 32>}, {pipeline_mode = #tpu.pipeline_mode<synchronous>, transform_indices = @transform_14, window_bounds = array<i64: 32, 128>}, {pipeline_mode = #tpu.pipeline_mode<synchronous>, transform_indices = @transform_15, window_bounds = array<i64: 1, 128>}, {pipeline_mode = #tpu.pipeline_mode<synchronous>, transform_indices = @transform_16, window_bounds = array<i64: 128, 32>}, {pipeline_mode = #tpu.pipeline_mode<synchronous>, transform_indices = @transform_17, window_bounds = array<i64: 1, 32>}, {transform_indices = @transform_18, window_bounds = array<i64: 16, 32>}]} {
    %c0 = arith.constant 0 : index
    %c0_0 = arith.constant 0 : index
    %0 = vector.load %arg1[%c0, %c0_0] : memref<16x32xbf16, #tpu.memory_space<vmem>>, vector<16x32xbf16>
    %c0_1 = arith.constant 0 : index
    %c0_2 = arith.constant 0 : index
    %1 = vector.load %arg2[%c0_1, %c0_2] : memref<32x32xbf16, #tpu.memory_space<vmem>>, vector<32x32xbf16>
    %c0_3 = arith.constant 0 : index
    %c0_4 = arith.constant 0 : index
    %2 = vector.load %arg3[%c0_3, %c0_4] : memref<32x32xbf16, #tpu.memory_space<vmem>>, vector<32x32xbf16>
    %cst = arith.constant dense<0.000000e+00> : vector<16x32xf32>
    %3 = tpu.matmul %0, %2, %cst {dimension_numbers = #tpu.dot_dimension_numbers<[1], [0], [0], [1], [0, 0, 1, 1], [], []>} : vector<16x32xbf16>, vector<32x32xbf16>, vector<16x32xf32> -> vector<16x32xf32>
    %c0_5 = arith.constant 0 : index
    %c0_6 = arith.constant 0 : index
    %4 = vector.load %arg6[%c0_5, %c0_6] : memref<1x32xf32, #tpu.memory_space<vmem>>, vector<1x32xf32>
    %5 = vector.broadcast %4 : vector<1x32xf32> to vector<16x32xf32>
    %6 = arith.addf %3, %5 : vector<16x32xf32>
    %cst_7 = arith.constant 0.353553385 : f32
    %7 = vector.broadcast %cst_7 : f32 to vector<16x32xf32>
    %8 = arith.mulf %6, %7 : vector<16x32xf32>
    %c0_8 = arith.constant 0 : index
    %c0_9 = arith.constant 0 : index
    %9 = vector.load %arg4[%c0_8, %c0_9] : memref<32x32xbf16, #tpu.memory_space<vmem>>, vector<32x32xbf16>
    %cst_10 = arith.constant dense<0.000000e+00> : vector<32x32xf32>
    %10 = tpu.matmul %1, %9, %cst_10 {dimension_numbers = #tpu.dot_dimension_numbers<[1], [0], [0], [1], [0, 0, 1, 1], [], []>} : vector<32x32xbf16>, vector<32x32xbf16>, vector<32x32xf32> -> vector<32x32xf32>
    %c0_11 = arith.constant 0 : index
    %c0_12 = arith.constant 0 : index
    %11 = vector.load %arg7[%c0_11, %c0_12] : memref<1x32xf32, #tpu.memory_space<vmem>>, vector<1x32xf32>
    %12 = vector.broadcast %11 : vector<1x32xf32> to vector<32x32xf32>
    %13 = arith.addf %10, %12 : vector<32x32xf32>
    %c0_13 = arith.constant 0 : index
    %c0_14 = arith.constant 0 : index
    %14 = vector.load %arg5[%c0_13, %c0_14] : memref<32x32xbf16, #tpu.memory_space<vmem>>, vector<32x32xbf16>
    %cst_15 = arith.constant dense<0.000000e+00> : vector<32x32xf32>
    %15 = tpu.matmul %1, %14, %cst_15 {dimension_numbers = #tpu.dot_dimension_numbers<[1], [0], [0], [1], [0, 0, 1, 1], [], []>} : vector<32x32xbf16>, vector<32x32xbf16>, vector<32x32xf32> -> vector<32x32xf32>
    %c0_16 = arith.constant 0 : index
    %c0_17 = arith.constant 0 : index
    %16 = vector.load %arg8[%c0_16, %c0_17] : memref<1x32xf32, #tpu.memory_space<vmem>>, vector<1x32xf32>
    %17 = vector.broadcast %16 : vector<1x32xf32> to vector<32x32xf32>
    %18 = arith.addf %15, %17 : vector<32x32xf32>
    %19 = vector.extract_strided_slice %8 {offsets = [0, 0], sizes = [8, 8], strides = [1, 1]} : vector<16x32xf32> to vector<8x8xf32>
    %20 = arith.truncf %19 : vector<8x8xf32> to vector<8x8xbf16>
    %21 = vector.extract_strided_slice %13 {offsets = [0, 0], sizes = [16, 8], strides = [1, 1]} : vector<32x32xf32> to vector<16x8xf32>
    %22 = arith.truncf %21 : vector<16x8xf32> to vector<16x8xbf16>
    %23 = vector.extract_strided_slice %18 {offsets = [0, 0], sizes = [16, 8], strides = [1, 1]} : vector<32x32xf32> to vector<16x8xf32>
    %24 = arith.truncf %23 : vector<16x8xf32> to vector<16x8xbf16>
    %cst_18 = arith.constant dense<0.000000e+00> : vector<8x16xf32>
    %25 = tpu.matmul %20, %22, %cst_18 {dimension_numbers = #tpu.dot_dimension_numbers<[1], [1], [0], [0], [0, 0, 1, 0], [], []>} : vector<8x8xbf16>, vector<16x8xbf16>, vector<8x16xf32> -> vector<8x16xf32>
    %cst_19 = arith.constant dense<0xFF800000> : vector<8xf32>
    %26 = vector.multi_reduction <maximumf>, %25, %cst_19 [1] : vector<8x16xf32> to vector<8xf32>
    %27 = vector.shape_cast %26 : vector<8xf32> to vector<8x1xf32>
    %28 = vector.broadcast %27 : vector<8x1xf32> to vector<8x16xf32>
    %29 = arith.subf %25, %28 : vector<8x16xf32>
    %30 = math.exp %29 : vector<8x16xf32>
    %cst_20 = arith.constant dense<0.000000e+00> : vector<8xf32>
    %31 = vector.multi_reduction <add>, %30, %cst_20 [1] : vector<8x16xf32> to vector<8xf32>
    %32 = vector.shape_cast %31 : vector<8xf32> to vector<8x1xf32>
    %33 = arith.truncf %30 : vector<8x16xf32> to vector<8x16xbf16>
    %cst_21 = arith.constant dense<0.000000e+00> : vector<8x8xf32>
    %34 = tpu.matmul %33, %24, %cst_21 {dimension_numbers = #tpu.dot_dimension_numbers<[1], [0], [0], [1], [0, 0, 1, 1], [], []>} : vector<8x16xbf16>, vector<16x8xbf16>, vector<8x8xf32> -> vector<8x8xf32>
    %35 = tpu.reciprocal %32 {approx = true} : vector<8x1xf32> -> vector<8x1xf32>
    %36 = vector.broadcast %35 : vector<8x1xf32> to vector<8x8xf32>
    %37 = arith.mulf %34, %36 : vector<8x8xf32>
    %38 = arith.truncf %37 : vector<8x8xf32> to vector<8x8xbf16>
    %c0_22 = arith.constant 0 : index
    %c0_23 = arith.constant 0 : index
    %c0_24 = arith.constant 0 : index
    %39 = vector.load %arg9[%c0_22, %c0_23, %c0_24] : memref<4x8x32xbf16, #tpu.memory_space<vmem>>, vector<1x8x32xbf16>
    %40 = vector.shape_cast %39 : vector<1x8x32xbf16> to vector<8x32xbf16>
    %cst_25 = arith.constant dense<0.000000e+00> : vector<8x32xf32>
    %41 = tpu.matmul %38, %40, %cst_25 {dimension_numbers = #tpu.dot_dimension_numbers<[1], [0], [0], [1], [0, 0, 1, 1], [], []>} : vector<8x8xbf16>, vector<8x32xbf16>, vector<8x32xf32> -> vector<8x32xf32>
    %42 = vector.extract_strided_slice %8 {offsets = [0, 8], sizes = [8, 8], strides = [1, 1]} : vector<16x32xf32> to vector<8x8xf32>
    %43 = arith.truncf %42 : vector<8x8xf32> to vector<8x8xbf16>
    %44 = vector.extract_strided_slice %13 {offsets = [0, 8], sizes = [16, 8], strides = [1, 1]} : vector<32x32xf32> to vector<16x8xf32>
    %45 = arith.truncf %44 : vector<16x8xf32> to vector<16x8xbf16>
    %46 = vector.extract_strided_slice %18 {offsets = [0, 8], sizes = [16, 8], strides = [1, 1]} : vector<32x32xf32> to vector<16x8xf32>
    %47 = arith.truncf %46 : vector<16x8xf32> to vector<16x8xbf16>
    %cst_26 = arith.constant dense<0.000000e+00> : vector<8x16xf32>
    %48 = tpu.matmul %43, %45, %cst_26 {dimension_numbers = #tpu.dot_dimension_numbers<[1], [1], [0], [0], [0, 0, 1, 0], [], []>} : vector<8x8xbf16>, vector<16x8xbf16>, vector<8x16xf32> -> vector<8x16xf32>
    %cst_27 = arith.constant dense<0xFF800000> : vector<8xf32>
    %49 = vector.multi_reduction <maximumf>, %48, %cst_27 [1] : vector<8x16xf32> to vector<8xf32>
    %50 = vector.shape_cast %49 : vector<8xf32> to vector<8x1xf32>
    %51 = vector.broadcast %50 : vector<8x1xf32> to vector<8x16xf32>
    %52 = arith.subf %48, %51 : vector<8x16xf32>
    %53 = math.exp %52 : vector<8x16xf32>
    %cst_28 = arith.constant dense<0.000000e+00> : vector<8xf32>
    %54 = vector.multi_reduction <add>, %53, %cst_28 [1] : vector<8x16xf32> to vector<8xf32>
    %55 = vector.shape_cast %54 : vector<8xf32> to vector<8x1xf32>
    %56 = arith.truncf %53 : vector<8x16xf32> to vector<8x16xbf16>
    %cst_29 = arith.constant dense<0.000000e+00> : vector<8x8xf32>
    %57 = tpu.matmul %56, %47, %cst_29 {dimension_numbers = #tpu.dot_dimension_numbers<[1], [0], [0], [1], [0, 0, 1, 1], [], []>} : vector<8x16xbf16>, vector<16x8xbf16>, vector<8x8xf32> -> vector<8x8xf32>
    %58 = tpu.reciprocal %55 {approx = true} : vector<8x1xf32> -> vector<8x1xf32>
    %59 = vector.broadcast %58 : vector<8x1xf32> to vector<8x8xf32>
    %60 = arith.mulf %57, %59 : vector<8x8xf32>
    %61 = arith.truncf %60 : vector<8x8xf32> to vector<8x8xbf16>
    %c1 = arith.constant 1 : index
    %c0_30 = arith.constant 0 : index
    %c0_31 = arith.constant 0 : index
    %62 = vector.load %arg9[%c1, %c0_30, %c0_31] : memref<4x8x32xbf16, #tpu.memory_space<vmem>>, vector<1x8x32xbf16>
    %63 = vector.shape_cast %62 : vector<1x8x32xbf16> to vector<8x32xbf16>
    %cst_32 = arith.constant dense<0.000000e+00> : vector<8x32xf32>
    %64 = tpu.matmul %61, %63, %cst_32 {dimension_numbers = #tpu.dot_dimension_numbers<[1], [0], [0], [1], [0, 0, 1, 1], [], []>} : vector<8x8xbf16>, vector<8x32xbf16>, vector<8x32xf32> -> vector<8x32xf32>
    %65 = arith.addf %41, %64 : vector<8x32xf32>
    %66 = vector.extract_strided_slice %8 {offsets = [0, 16], sizes = [8, 8], strides = [1, 1]} : vector<16x32xf32> to vector<8x8xf32>
    %67 = arith.truncf %66 : vector<8x8xf32> to vector<8x8xbf16>
    %68 = vector.extract_strided_slice %13 {offsets = [0, 16], sizes = [16, 8], strides = [1, 1]} : vector<32x32xf32> to vector<16x8xf32>
    %69 = arith.truncf %68 : vector<16x8xf32> to vector<16x8xbf16>
    %70 = vector.extract_strided_slice %18 {offsets = [0, 16], sizes = [16, 8], strides = [1, 1]} : vector<32x32xf32> to vector<16x8xf32>
    %71 = arith.truncf %70 : vector<16x8xf32> to vector<16x8xbf16>
    %cst_33 = arith.constant dense<0.000000e+00> : vector<8x16xf32>
    %72 = tpu.matmul %67, %69, %cst_33 {dimension_numbers = #tpu.dot_dimension_numbers<[1], [1], [0], [0], [0, 0, 1, 0], [], []>} : vector<8x8xbf16>, vector<16x8xbf16>, vector<8x16xf32> -> vector<8x16xf32>
    %cst_34 = arith.constant dense<0xFF800000> : vector<8xf32>
    %73 = vector.multi_reduction <maximumf>, %72, %cst_34 [1] : vector<8x16xf32> to vector<8xf32>
    %74 = vector.shape_cast %73 : vector<8xf32> to vector<8x1xf32>
    %75 = vector.broadcast %74 : vector<8x1xf32> to vector<8x16xf32>
    %76 = arith.subf %72, %75 : vector<8x16xf32>
    %77 = math.exp %76 : vector<8x16xf32>
    %cst_35 = arith.constant dense<0.000000e+00> : vector<8xf32>
    %78 = vector.multi_reduction <add>, %77, %cst_35 [1] : vector<8x16xf32> to vector<8xf32>
    %79 = vector.shape_cast %78 : vector<8xf32> to vector<8x1xf32>
    %80 = arith.truncf %77 : vector<8x16xf32> to vector<8x16xbf16>
    %cst_36 = arith.constant dense<0.000000e+00> : vector<8x8xf32>
    %81 = tpu.matmul %80, %71, %cst_36 {dimension_numbers = #tpu.dot_dimension_numbers<[1], [0], [0], [1], [0, 0, 1, 1], [], []>} : vector<8x16xbf16>, vector<16x8xbf16>, vector<8x8xf32> -> vector<8x8xf32>
    %82 = tpu.reciprocal %79 {approx = true} : vector<8x1xf32> -> vector<8x1xf32>
    %83 = vector.broadcast %82 : vector<8x1xf32> to vector<8x8xf32>
    %84 = arith.mulf %81, %83 : vector<8x8xf32>
    %85 = arith.truncf %84 : vector<8x8xf32> to vector<8x8xbf16>
    %c2 = arith.constant 2 : index
    %c0_37 = arith.constant 0 : index
    %c0_38 = arith.constant 0 : index
    %86 = vector.load %arg9[%c2, %c0_37, %c0_38] : memref<4x8x32xbf16, #tpu.memory_space<vmem>>, vector<1x8x32xbf16>
    %87 = vector.shape_cast %86 : vector<1x8x32xbf16> to vector<8x32xbf16>
    %cst_39 = arith.constant dense<0.000000e+00> : vector<8x32xf32>
    %88 = tpu.matmul %85, %87, %cst_39 {dimension_numbers = #tpu.dot_dimension_numbers<[1], [0], [0], [1], [0, 0, 1, 1], [], []>} : vector<8x8xbf16>, vector<8x32xbf16>, vector<8x32xf32> -> vector<8x32xf32>
    %89 = arith.addf %65, %88 : vector<8x32xf32>
    %90 = vector.extract_strided_slice %8 {offsets = [0, 24], sizes = [8, 8], strides = [1, 1]} : vector<16x32xf32> to vector<8x8xf32>
    %91 = arith.truncf %90 : vector<8x8xf32> to vector<8x8xbf16>
    %92 = vector.extract_strided_slice %13 {offsets = [0, 24], sizes = [16, 8], strides = [1, 1]} : vector<32x32xf32> to vector<16x8xf32>
    %93 = arith.truncf %92 : vector<16x8xf32> to vector<16x8xbf16>
    %94 = vector.extract_strided_slice %18 {offsets = [0, 24], sizes = [16, 8], strides = [1, 1]} : vector<32x32xf32> to vector<16x8xf32>
    %95 = arith.truncf %94 : vector<16x8xf32> to vector<16x8xbf16>
    %cst_40 = arith.constant dense<0.000000e+00> : vector<8x16xf32>
    %96 = tpu.matmul %91, %93, %cst_40 {dimension_numbers = #tpu.dot_dimension_numbers<[1], [1], [0], [0], [0, 0, 1, 0], [], []>} : vector<8x8xbf16>, vector<16x8xbf16>, vector<8x16xf32> -> vector<8x16xf32>
    %cst_41 = arith.constant dense<0xFF800000> : vector<8xf32>
    %97 = vector.multi_reduction <maximumf>, %96, %cst_41 [1] : vector<8x16xf32> to vector<8xf32>
    %98 = vector.shape_cast %97 : vector<8xf32> to vector<8x1xf32>
    %99 = vector.broadcast %98 : vector<8x1xf32> to vector<8x16xf32>
    %100 = arith.subf %96, %99 : vector<8x16xf32>
    %101 = math.exp %100 : vector<8x16xf32>
    %cst_42 = arith.constant dense<0.000000e+00> : vector<8xf32>
    %102 = vector.multi_reduction <add>, %101, %cst_42 [1] : vector<8x16xf32> to vector<8xf32>
    %103 = vector.shape_cast %102 : vector<8xf32> to vector<8x1xf32>
    %104 = arith.truncf %101 : vector<8x16xf32> to vector<8x16xbf16>
    %cst_43 = arith.constant dense<0.000000e+00> : vector<8x8xf32>
    %105 = tpu.matmul %104, %95, %cst_43 {dimension_numbers = #tpu.dot_dimension_numbers<[1], [0], [0], [1], [0, 0, 1, 1], [], []>} : vector<8x16xbf16>, vector<16x8xbf16>, vector<8x8xf32> -> vector<8x8xf32>
    %106 = tpu.reciprocal %103 {approx = true} : vector<8x1xf32> -> vector<8x1xf32>
    %107 = vector.broadcast %106 : vector<8x1xf32> to vector<8x8xf32>
    %108 = arith.mulf %105, %107 : vector<8x8xf32>
    %109 = arith.truncf %108 : vector<8x8xf32> to vector<8x8xbf16>
    %c3 = arith.constant 3 : index
    %c0_44 = arith.constant 0 : index
    %c0_45 = arith.constant 0 : index
    %110 = vector.load %arg9[%c3, %c0_44, %c0_45] : memref<4x8x32xbf16, #tpu.memory_space<vmem>>, vector<1x8x32xbf16>
    %111 = vector.shape_cast %110 : vector<1x8x32xbf16> to vector<8x32xbf16>
    %cst_46 = arith.constant dense<0.000000e+00> : vector<8x32xf32>
    %112 = tpu.matmul %109, %111, %cst_46 {dimension_numbers = #tpu.dot_dimension_numbers<[1], [0], [0], [1], [0, 0, 1, 1], [], []>} : vector<8x8xbf16>, vector<8x32xbf16>, vector<8x32xf32> -> vector<8x32xf32>
    %113 = arith.addf %89, %112 : vector<8x32xf32>
    %c0_47 = arith.constant 0 : index
    %c0_48 = arith.constant 0 : index
    %114 = vector.load %arg20[%c0_47, %c0_48] : memref<16x32xf32, #tpu.memory_space<vmem>>, vector<8x32xf32>
    tpu.vector_store %arg20[%c0_47, %c0_48], %113 {strides = array<i32>} : memref<16x32xf32, #tpu.memory_space<vmem>>, vector<8x32xf32>,
    %115 = vector.extract_strided_slice %8 {offsets = [8, 0], sizes = [8, 8], strides = [1, 1]} : vector<16x32xf32> to vector<8x8xf32>
    %116 = arith.truncf %115 : vector<8x8xf32> to vector<8x8xbf16>
    %117 = vector.extract_strided_slice %13 {offsets = [16, 0], sizes = [16, 8], strides = [1, 1]} : vector<32x32xf32> to vector<16x8xf32>
    %118 = arith.truncf %117 : vector<16x8xf32> to vector<16x8xbf16>
    %119 = vector.extract_strided_slice %18 {offsets = [16, 0], sizes = [16, 8], strides = [1, 1]} : vector<32x32xf32> to vector<16x8xf32>
    %120 = arith.truncf %119 : vector<16x8xf32> to vector<16x8xbf16>
    %cst_49 = arith.constant dense<0.000000e+00> : vector<8x16xf32>
    %121 = tpu.matmul %116, %118, %cst_49 {dimension_numbers = #tpu.dot_dimension_numbers<[1], [1], [0], [0], [0, 0, 1, 0], [], []>} : vector<8x8xbf16>, vector<16x8xbf16>, vector<8x16xf32> -> vector<8x16xf32>
    %cst_50 = arith.constant dense<0xFF800000> : vector<8xf32>
    %122 = vector.multi_reduction <maximumf>, %121, %cst_50 [1] : vector<8x16xf32> to vector<8xf32>
    %123 = vector.shape_cast %122 : vector<8xf32> to vector<8x1xf32>
    %124 = vector.broadcast %123 : vector<8x1xf32> to vector<8x16xf32>
    %125 = arith.subf %121, %124 : vector<8x16xf32>
    %126 = math.exp %125 : vector<8x16xf32>
    %cst_51 = arith.constant dense<0.000000e+00> : vector<8xf32>
    %127 = vector.multi_reduction <add>, %126, %cst_51 [1] : vector<8x16xf32> to vector<8xf32>
    %128 = vector.shape_cast %127 : vector<8xf32> to vector<8x1xf32>
    %129 = arith.truncf %126 : vector<8x16xf32> to vector<8x16xbf16>
    %cst_52 = arith.constant dense<0.000000e+00> : vector<8x8xf32>
    %130 = tpu.matmul %129, %120, %cst_52 {dimension_numbers = #tpu.dot_dimension_numbers<[1], [0], [0], [1], [0, 0, 1, 1], [], []>} : vector<8x16xbf16>, vector<16x8xbf16>, vector<8x8xf32> -> vector<8x8xf32>
    %131 = tpu.reciprocal %128 {approx = true} : vector<8x1xf32> -> vector<8x1xf32>
    %132 = vector.broadcast %131 : vector<8x1xf32> to vector<8x8xf32>
    %133 = arith.mulf %130, %132 : vector<8x8xf32>
    %134 = arith.truncf %133 : vector<8x8xf32> to vector<8x8xbf16>
    %c0_53 = arith.constant 0 : index
    %c0_54 = arith.constant 0 : index
    %c0_55 = arith.constant 0 : index
    %135 = vector.load %arg9[%c0_53, %c0_54, %c0_55] : memref<4x8x32xbf16, #tpu.memory_space<vmem>>, vector<1x8x32xbf16>
    %136 = vector.shape_cast %135 : vector<1x8x32xbf16> to vector<8x32xbf16>
    %cst_56 = arith.constant dense<0.000000e+00> : vector<8x32xf32>
    %137 = tpu.matmul %134, %136, %cst_56 {dimension_numbers = #tpu.dot_dimension_numbers<[1], [0], [0], [1], [0, 0, 1, 1], [], []>} : vector<8x8xbf16>, vector<8x32xbf16>, vector<8x32xf32> -> vector<8x32xf32>
    %138 = vector.extract_strided_slice %8 {offsets = [8, 8], sizes = [8, 8], strides = [1, 1]} : vector<16x32xf32> to vector<8x8xf32>
    %139 = arith.truncf %138 : vector<8x8xf32> to vector<8x8xbf16>
    %140 = vector.extract_strided_slice %13 {offsets = [16, 8], sizes = [16, 8], strides = [1, 1]} : vector<32x32xf32> to vector<16x8xf32>
    %141 = arith.truncf %140 : vector<16x8xf32> to vector<16x8xbf16>
    %142 = vector.extract_strided_slice %18 {offsets = [16, 8], sizes = [16, 8], strides = [1, 1]} : vector<32x32xf32> to vector<16x8xf32>
    %143 = arith.truncf %142 : vector<16x8xf32> to vector<16x8xbf16>
    %cst_57 = arith.constant dense<0.000000e+00> : vector<8x16xf32>
    %144 = tpu.matmul %139, %141, %cst_57 {dimension_numbers = #tpu.dot_dimension_numbers<[1], [1], [0], [0], [0, 0, 1, 0], [], []>} : vector<8x8xbf16>, vector<16x8xbf16>, vector<8x16xf32> -> vector<8x16xf32>
    %cst_58 = arith.constant dense<0xFF800000> : vector<8xf32>
    %145 = vector.multi_reduction <maximumf>, %144, %cst_58 [1] : vector<8x16xf32> to vector<8xf32>
    %146 = vector.shape_cast %145 : vector<8xf32> to vector<8x1xf32>
    %147 = vector.broadcast %146 : vector<8x1xf32> to vector<8x16xf32>
    %148 = arith.subf %144, %147 : vector<8x16xf32>
    %149 = math.exp %148 : vector<8x16xf32>
    %cst_59 = arith.constant dense<0.000000e+00> : vector<8xf32>
    %150 = vector.multi_reduction <add>, %149, %cst_59 [1] : vector<8x16xf32> to vector<8xf32>
    %151 = vector.shape_cast %150 : vector<8xf32> to vector<8x1xf32>
    %152 = arith.truncf %149 : vector<8x16xf32> to vector<8x16xbf16>
    %cst_60 = arith.constant dense<0.000000e+00> : vector<8x8xf32>
    %153 = tpu.matmul %152, %143, %cst_60 {dimension_numbers = #tpu.dot_dimension_numbers<[1], [0], [0], [1], [0, 0, 1, 1], [], []>} : vector<8x16xbf16>, vector<16x8xbf16>, vector<8x8xf32> -> vector<8x8xf32>
    %154 = tpu.reciprocal %151 {approx = true} : vector<8x1xf32> -> vector<8x1xf32>
    %155 = vector.broadcast %154 : vector<8x1xf32> to vector<8x8xf32>
    %156 = arith.mulf %153, %155 : vector<8x8xf32>
    %157 = arith.truncf %156 : vector<8x8xf32> to vector<8x8xbf16>
    %c1_61 = arith.constant 1 : index
    %c0_62 = arith.constant 0 : index
    %c0_63 = arith.constant 0 : index
    %158 = vector.load %arg9[%c1_61, %c0_62, %c0_63] : memref<4x8x32xbf16, #tpu.memory_space<vmem>>, vector<1x8x32xbf16>
    %159 = vector.shape_cast %158 : vector<1x8x32xbf16> to vector<8x32xbf16>
    %cst_64 = arith.constant dense<0.000000e+00> : vector<8x32xf32>
    %160 = tpu.matmul %157, %159, %cst_64 {dimension_numbers = #tpu.dot_dimension_numbers<[1], [0], [0], [1], [0, 0, 1, 1], [], []>} : vector<8x8xbf16>, vector<8x32xbf16>, vector<8x32xf32> -> vector<8x32xf32>
    %161 = arith.addf %137, %160 : vector<8x32xf32>
    %162 = vector.extract_strided_slice %8 {offsets = [8, 16], sizes = [8, 8], strides = [1, 1]} : vector<16x32xf32> to vector<8x8xf32>
    %163 = arith.truncf %162 : vector<8x8xf32> to vector<8x8xbf16>
    %164 = vector.extract_strided_slice %13 {offsets = [16, 16], sizes = [16, 8], strides = [1, 1]} : vector<32x32xf32> to vector<16x8xf32>
    %165 = arith.truncf %164 : vector<16x8xf32> to vector<16x8xbf16>
    %166 = vector.extract_strided_slice %18 {offsets = [16, 16], sizes = [16, 8], strides = [1, 1]} : vector<32x32xf32> to vector<16x8xf32>
    %167 = arith.truncf %166 : vector<16x8xf32> to vector<16x8xbf16>
    %cst_65 = arith.constant dense<0.000000e+00> : vector<8x16xf32>
    %168 = tpu.matmul %163, %165, %cst_65 {dimension_numbers = #tpu.dot_dimension_numbers<[1], [1], [0], [0], [0, 0, 1, 0], [], []>} : vector<8x8xbf16>, vector<16x8xbf16>, vector<8x16xf32> -> vector<8x16xf32>
    %cst_66 = arith.constant dense<0xFF800000> : vector<8xf32>
    %169 = vector.multi_reduction <maximumf>, %168, %cst_66 [1] : vector<8x16xf32> to vector<8xf32>
    %170 = vector.shape_cast %169 : vector<8xf32> to vector<8x1xf32>
    %171 = vector.broadcast %170 : vector<8x1xf32> to vector<8x16xf32>
    %172 = arith.subf %168, %171 : vector<8x16xf32>
    %173 = math.exp %172 : vector<8x16xf32>
    %cst_67 = arith.constant dense<0.000000e+00> : vector<8xf32>
    %174 = vector.multi_reduction <add>, %173, %cst_67 [1] : vector<8x16xf32> to vector<8xf32>
    %175 = vector.shape_cast %174 : vector<8xf32> to vector<8x1xf32>
    %176 = arith.truncf %173 : vector<8x16xf32> to vector<8x16xbf16>
    %cst_68 = arith.constant dense<0.000000e+00> : vector<8x8xf32>
    %177 = tpu.matmul %176, %167, %cst_68 {dimension_numbers = #tpu.dot_dimension_numbers<[1], [0], [0], [1], [0, 0, 1, 1], [], []>} : vector<8x16xbf16>, vector<16x8xbf16>, vector<8x8xf32> -> vector<8x8xf32>
    %178 = tpu.reciprocal %175 {approx = true} : vector<8x1xf32> -> vector<8x1xf32>
    %179 = vector.broadcast %178 : vector<8x1xf32> to vector<8x8xf32>
    %180 = arith.mulf %177, %179 : vector<8x8xf32>
    %181 = arith.truncf %180 : vector<8x8xf32> to vector<8x8xbf16>
    %c2_69 = arith.constant 2 : index
    %c0_70 = arith.constant 0 : index
    %c0_71 = arith.constant 0 : index
    %182 = vector.load %arg9[%c2_69, %c0_70, %c0_71] : memref<4x8x32xbf16, #tpu.memory_space<vmem>>, vector<1x8x32xbf16>
    %183 = vector.shape_cast %182 : vector<1x8x32xbf16> to vector<8x32xbf16>
    %cst_72 = arith.constant dense<0.000000e+00> : vector<8x32xf32>
    %184 = tpu.matmul %181, %183, %cst_72 {dimension_numbers = #tpu.dot_dimension_numbers<[1], [0], [0], [1], [0, 0, 1, 1], [], []>} : vector<8x8xbf16>, vector<8x32xbf16>, vector<8x32xf32> -> vector<8x32xf32>
    %185 = arith.addf %161, %184 : vector<8x32xf32>
    %186 = vector.extract_strided_slice %8 {offsets = [8, 24], sizes = [8, 8], strides = [1, 1]} : vector<16x32xf32> to vector<8x8xf32>
    %187 = arith.truncf %186 : vector<8x8xf32> to vector<8x8xbf16>
    %188 = vector.extract_strided_slice %13 {offsets = [16, 24], sizes = [16, 8], strides = [1, 1]} : vector<32x32xf32> to vector<16x8xf32>
    %189 = arith.truncf %188 : vector<16x8xf32> to vector<16x8xbf16>
    %190 = vector.extract_strided_slice %18 {offsets = [16, 24], sizes = [16, 8], strides = [1, 1]} : vector<32x32xf32> to vector<16x8xf32>
    %191 = arith.truncf %190 : vector<16x8xf32> to vector<16x8xbf16>
    %cst_73 = arith.constant dense<0.000000e+00> : vector<8x16xf32>
    %192 = tpu.matmul %187, %189, %cst_73 {dimension_numbers = #tpu.dot_dimension_numbers<[1], [1], [0], [0], [0, 0, 1, 0], [], []>} : vector<8x8xbf16>, vector<16x8xbf16>, vector<8x16xf32> -> vector<8x16xf32>
    %cst_74 = arith.constant dense<0xFF800000> : vector<8xf32>
    %193 = vector.multi_reduction <maximumf>, %192, %cst_74 [1] : vector<8x16xf32> to vector<8xf32>
    %194 = vector.shape_cast %193 : vector<8xf32> to vector<8x1xf32>
    %195 = vector.broadcast %194 : vector<8x1xf32> to vector<8x16xf32>
    %196 = arith.subf %192, %195 : vector<8x16xf32>
    %197 = math.exp %196 : vector<8x16xf32>
    %cst_75 = arith.constant dense<0.000000e+00> : vector<8xf32>
    %198 = vector.multi_reduction <add>, %197, %cst_75 [1] : vector<8x16xf32> to vector<8xf32>
    %199 = vector.shape_cast %198 : vector<8xf32> to vector<8x1xf32>
    %200 = arith.truncf %197 : vector<8x16xf32> to vector<8x16xbf16>
    %cst_76 = arith.constant dense<0.000000e+00> : vector<8x8xf32>
    %201 = tpu.matmul %200, %191, %cst_76 {dimension_numbers = #tpu.dot_dimension_numbers<[1], [0], [0], [1], [0, 0, 1, 1], [], []>} : vector<8x16xbf16>, vector<16x8xbf16>, vector<8x8xf32> -> vector<8x8xf32>
    %202 = tpu.reciprocal %199 {approx = true} : vector<8x1xf32> -> vector<8x1xf32>
    %203 = vector.broadcast %202 : vector<8x1xf32> to vector<8x8xf32>
    %204 = arith.mulf %201, %203 : vector<8x8xf32>
    %205 = arith.truncf %204 : vector<8x8xf32> to vector<8x8xbf16>
    %c3_77 = arith.constant 3 : index
    %c0_78 = arith.constant 0 : index
    %c0_79 = arith.constant 0 : index
    %206 = vector.load %arg9[%c3_77, %c0_78, %c0_79] : memref<4x8x32xbf16, #tpu.memory_space<vmem>>, vector<1x8x32xbf16>
    %207 = vector.shape_cast %206 : vector<1x8x32xbf16> to vector<8x32xbf16>
    %cst_80 = arith.constant dense<0.000000e+00> : vector<8x32xf32>
    %208 = tpu.matmul %205, %207, %cst_80 {dimension_numbers = #tpu.dot_dimension_numbers<[1], [0], [0], [1], [0, 0, 1, 1], [], []>} : vector<8x8xbf16>, vector<8x32xbf16>, vector<8x32xf32> -> vector<8x32xf32>
    %209 = arith.addf %185, %208 : vector<8x32xf32>
    %c8 = arith.constant 8 : index
    %c0_81 = arith.constant 0 : index
    %210 = vector.load %arg20[%c8, %c0_81] : memref<16x32xf32, #tpu.memory_space<vmem>>, vector<8x32xf32>
    tpu.vector_store %arg20[%c8, %c0_81], %209 {strides = array<i32>} : memref<16x32xf32, #tpu.memory_space<vmem>>, vector<8x32xf32>,
    %211 = arith.extf %0 : vector<16x32xbf16> to vector<16x32xf32>
    %c0_82 = arith.constant 0 : index
    %c0_83 = arith.constant 0 : index
    %212 = vector.load %arg20[%c0_82, %c0_83] : memref<16x32xf32, #tpu.memory_space<vmem>>, vector<16x32xf32>
    %213 = arith.addf %211, %212 : vector<16x32xf32>
    %c0_84 = arith.constant 0 : index
    %c0_85 = arith.constant 0 : index
    %214 = vector.load %arg10[%c0_84, %c0_85] : memref<1x32xf32, #tpu.memory_space<vmem>>, vector<1x32xf32>
    %215 = vector.broadcast %214 : vector<1x32xf32> to vector<16x32xf32>
    %216 = arith.addf %213, %215 : vector<16x32xf32>
    %c0_86 = arith.constant 0 : index
    %c0_87 = arith.constant 0 : index
    %217 = vector.load %arg11[%c0_86, %c0_87] : memref<1x32xf32, #tpu.memory_space<vmem>>, vector<1x32xf32>
    %c0_88 = arith.constant 0 : index
    %c0_89 = arith.constant 0 : index
    %218 = vector.load %arg12[%c0_88, %c0_89] : memref<1x32xf32, #tpu.memory_space<vmem>>, vector<1x32xf32>
    %cst_90 = arith.constant dense<0.000000e+00> : vector<16xf32>
    %219 = vector.multi_reduction <add>, %216, %cst_90 [1] : vector<16x32xf32> to vector<16xf32>
    %220 = vector.shape_cast %219 : vector<16xf32> to vector<16x1xf32>
    %cst_91 = arith.constant 3.200000e+01 : f32
    %221 = vector.broadcast %cst_91 : f32 to vector<16x1xf32>
    %222 = arith.divf %220, %221 : vector<16x1xf32>
    %223 = vector.broadcast %222 : vector<16x1xf32> to vector<16x32xf32>
    %224 = arith.subf %216, %223 : vector<16x32xf32>
    %225 = arith.mulf %224, %224 : vector<16x32xf32>
    %cst_92 = arith.constant dense<0.000000e+00> : vector<16xf32>
    %226 = vector.multi_reduction <add>, %225, %cst_92 [1] : vector<16x32xf32> to vector<16xf32>
    %227 = vector.shape_cast %226 : vector<16xf32> to vector<16x1xf32>
    %cst_93 = arith.constant 3.200000e+01 : f32
    %228 = vector.broadcast %cst_93 : f32 to vector<16x1xf32>
    %229 = arith.divf %227, %228 : vector<16x1xf32>
    %230 = vector.broadcast %222 : vector<16x1xf32> to vector<16x32xf32>
    %231 = arith.subf %216, %230 : vector<16x32xf32>
    %cst_94 = arith.constant 9.99999974E-6 : f32
    %232 = vector.broadcast %cst_94 : f32 to vector<16x1xf32>
    %233 = arith.addf %229, %232 : vector<16x1xf32>
    %234 = math.rsqrt %233 : vector<16x1xf32>
    %235 = vector.broadcast %234 : vector<16x1xf32> to vector<16x32xf32>
    %236 = arith.mulf %231, %235 : vector<16x32xf32>
    %237 = vector.broadcast %217 : vector<1x32xf32> to vector<16x32xf32>
    %238 = arith.mulf %236, %237 : vector<16x32xf32>
    %239 = vector.broadcast %218 : vector<1x32xf32> to vector<16x32xf32>
    %240 = arith.addf %238, %239 : vector<16x32xf32>
    %241 = arith.truncf %240 : vector<16x32xf32> to vector<16x32xbf16>
    %c0_95 = arith.constant 0 : index
    %c0_96 = arith.constant 0 : index
    %242 = vector.load %arg15[%c0_95, %c0_96] : memref<32x128xbf16, #tpu.memory_space<vmem>>, vector<32x128xbf16>
    %cst_97 = arith.constant dense<0.000000e+00> : vector<16x128xf32>
    %243 = tpu.matmul %241, %242, %cst_97 {dimension_numbers = #tpu.dot_dimension_numbers<[1], [0], [0], [1], [0, 0, 1, 1], [], []>} : vector<16x32xbf16>, vector<32x128xbf16>, vector<16x128xf32> -> vector<16x128xf32>
    %c0_98 = arith.constant 0 : index
    %c0_99 = arith.constant 0 : index
    %244 = vector.load %arg16[%c0_98, %c0_99] : memref<1x128xf32, #tpu.memory_space<vmem>>, vector<1x128xf32>
    %245 = vector.broadcast %244 : vector<1x128xf32> to vector<16x128xf32>
    %246 = arith.addf %243, %245 : vector<16x128xf32>
    %cst_100 = arith.constant 5.000000e-01 : f32
    %247 = vector.broadcast %cst_100 : f32 to vector<16x128xf32>
    %248 = arith.mulf %247, %246 : vector<16x128xf32>
    %cst_101 = arith.constant 0.707106769 : f32
    %249 = vector.broadcast %cst_101 : f32 to vector<16x128xf32>
    %250 = arith.mulf %246, %249 : vector<16x128xf32>
    %251 = math.erf %250 : vector<16x128xf32>
    %cst_102 = arith.constant 1.000000e+00 : f32
    %252 = vector.broadcast %cst_102 : f32 to vector<16x128xf32>
    %253 = arith.addf %252, %251 : vector<16x128xf32>
    %254 = arith.mulf %248, %253 : vector<16x128xf32>
    %255 = arith.truncf %254 : vector<16x128xf32> to vector<16x128xbf16>
    %c0_103 = arith.constant 0 : index
    %c0_104 = arith.constant 0 : index
    %256 = vector.load %arg17[%c0_103, %c0_104] : memref<128x32xbf16, #tpu.memory_space<vmem>>, vector<128x32xbf16>
    %cst_105 = arith.constant dense<0.000000e+00> : vector<16x32xf32>
    %257 = tpu.matmul %255, %256, %cst_105 {dimension_numbers = #tpu.dot_dimension_numbers<[1], [0], [0], [1], [0, 0, 1, 1], [], []>} : vector<16x128xbf16>, vector<128x32xbf16>, vector<16x32xf32> -> vector<16x32xf32>
    %c0_106 = arith.constant 0 : index
    %c0_107 = arith.constant 0 : index
    %258 = vector.load %arg18[%c0_106, %c0_107] : memref<1x32xf32, #tpu.memory_space<vmem>>, vector<1x32xf32>
    %259 = vector.broadcast %258 : vector<1x32xf32> to vector<16x32xf32>
    %260 = arith.addf %257, %259 : vector<16x32xf32>
    %261 = arith.addf %240, %260 : vector<16x32xf32>
    %c0_108 = arith.constant 0 : index
    %c0_109 = arith.constant 0 : index
    %262 = vector.load %arg13[%c0_108, %c0_109] : memref<1x32xf32, #tpu.memory_space<vmem>>, vector<1x32xf32>
    %c0_110 = arith.constant 0 : index
    %c0_111 = arith.constant 0 : index
    %263 = vector.load %arg14[%c0_110, %c0_111] : memref<1x32xf32, #tpu.memory_space<vmem>>, vector<1x32xf32>
    %cst_112 = arith.constant dense<0.000000e+00> : vector<16xf32>
    %264 = vector.multi_reduction <add>, %261, %cst_112 [1] : vector<16x32xf32> to vector<16xf32>
    %265 = vector.shape_cast %264 : vector<16xf32> to vector<16x1xf32>
    %cst_113 = arith.constant 3.200000e+01 : f32
    %266 = vector.broadcast %cst_113 : f32 to vector<16x1xf32>
    %267 = arith.divf %265, %266 : vector<16x1xf32>
    %268 = vector.broadcast %267 : vector<16x1xf32> to vector<16x32xf32>
    %269 = arith.subf %261, %268 : vector<16x32xf32>
    %270 = arith.mulf %269, %269 : vector<16x32xf32>
    %cst_114 = arith.constant dense<0.000000e+00> : vector<16xf32>
    %271 = vector.multi_reduction <add>, %270, %cst_114 [1] : vector<16x32xf32> to vector<16xf32>
    %272 = vector.shape_cast %271 : vector<16xf32> to vector<16x1xf32>
    %cst_115 = arith.constant 3.200000e+01 : f32
    %273 = vector.broadcast %cst_115 : f32 to vector<16x1xf32>
    %274 = arith.divf %272, %273 : vector<16x1xf32>
    %275 = vector.broadcast %267 : vector<16x1xf32> to vector<16x32xf32>
    %276 = arith.subf %261, %275 : vector<16x32xf32>
    %cst_116 = arith.constant 9.99999974E-6 : f32
    %277 = vector.broadcast %cst_116 : f32 to vector<16x1xf32>
    %278 = arith.addf %274, %277 : vector<16x1xf32>
    %279 = math.rsqrt %278 : vector<16x1xf32>
    %280 = vector.broadcast %279 : vector<16x1xf32> to vector<16x32xf32>
    %281 = arith.mulf %276, %280 : vector<16x32xf32>
    %282 = vector.broadcast %262 : vector<1x32xf32> to vector<16x32xf32>
    %283 = arith.mulf %281, %282 : vector<16x32xf32>
    %284 = vector.broadcast %263 : vector<1x32xf32> to vector<16x32xf32>
    %285 = arith.addf %283, %284 : vector<16x32xf32>
    %286 = arith.truncf %285 : vector<16x32xf32> to vector<16x32xbf16>
    %c0_117 = arith.constant 0 : index
    %c0_118 = arith.constant 0 : index
    %287 = vector.load %arg19[%c0_117, %c0_118] : memref<16x32xbf16, #tpu.memory_space<vmem>>, vector<16x32xbf16>
    tpu.vector_store %arg19[%c0_117, %c0_118], %286 {strides = array<i32>} : memref<16x32xbf16, #tpu.memory_space<vmem>>, vector<16x32xbf16>,
    return
  }
  func.func @transform_0(%arg0: i32) -> (i32, i32) {
    %c0_i32 = arith.constant 0 : i32
    %c0_i32_0 = arith.constant 0 : i32
    return %arg0, %c0_i32 : i32, i32
  }
  func.func @transform_1(%arg0: i32) -> (i32, i32) {
    %c0_i32 = arith.constant 0 : i32
    %c0_i32_0 = arith.constant 0 : i32
    return %arg0, %c0_i32 : i32, i32
  }
  func.func @transform_2(%arg0: i32) -> (i32, i32) {
    %c0_i32 = arith.constant 0 : i32
    %c0_i32_0 = arith.constant 0 : i32
    %c0_i32_1 = arith.constant 0 : i32
    return %c0_i32, %c0_i32_0 : i32, i32
  }
  func.func @transform_3(%arg0: i32) -> (i32, i32) {
    %c0_i32 = arith.constant 0 : i32
    %c0_i32_0 = arith.constant 0 : i32
    %c0_i32_1 = arith.constant 0 : i32
    return %c0_i32, %c0_i32_0 : i32, i32
  }
  func.func @transform_4(%arg0: i32) -> (i32, i32) {
    %c0_i32 = arith.constant 0 : i32
    %c0_i32_0 = arith.constant 0 : i32
    %c0_i32_1 = arith.constant 0 : i32
    return %c0_i32, %c0_i32_0 : i32, i32
  }
  func.func @transform_5(%arg0: i32) -> (i32, i32) {
    %c0_i32 = arith.constant 0 : i32
    %c0_i32_0 = arith.constant 0 : i32
    %c0_i32_1 = arith.constant 0 : i32
    return %c0_i32, %c0_i32_0 : i32, i32
  }
  func.func @transform_6(%arg0: i32) -> (i32, i32) {
    %c0_i32 = arith.constant 0 : i32
    %c0_i32_0 = arith.constant 0 : i32
    %c0_i32_1 = arith.constant 0 : i32
    return %c0_i32, %c0_i32_0 : i32, i32
  }
  func.func @transform_7(%arg0: i32) -> (i32, i32) {
    %c0_i32 = arith.constant 0 : i32
    %c0_i32_0 = arith.constant 0 : i32
    %c0_i32_1 = arith.constant 0 : i32
    return %c0_i32, %c0_i32_0 : i32, i32
  }
  func.func @transform_8(%arg0: i32) -> (i32, i32, i32) {
    %c0_i32 = arith.constant 0 : i32
    %c0_i32_0 = arith.constant 0 : i32
    %c0_i32_1 = arith.constant 0 : i32
    %c0_i32_2 = arith.constant 0 : i32
    return %c0_i32, %c0_i32_0, %c0_i32_1 : i32, i32, i32
  }
  func.func @transform_9(%arg0: i32) -> (i32, i32) {
    %c0_i32 = arith.constant 0 : i32
    %c0_i32_0 = arith.constant 0 : i32
    %c0_i32_1 = arith.constant 0 : i32
    return %c0_i32, %c0_i32_0 : i32, i32
  }
  func.func @transform_10(%arg0: i32) -> (i32, i32) {
    %c0_i32 = arith.constant 0 : i32
    %c0_i32_0 = arith.constant 0 : i32
    %c0_i32_1 = arith.constant 0 : i32
    return %c0_i32, %c0_i32_0 : i32, i32
  }
  func.func @transform_11(%arg0: i32) -> (i32, i32) {
    %c0_i32 = arith.constant 0 : i32
    %c0_i32_0 = arith.constant 0 : i32
    %c0_i32_1 = arith.constant 0 : i32
    return %c0_i32, %c0_i32_0 : i32, i32
  }
  func.func @transform_12(%arg0: i32) -> (i32, i32) {
    %c0_i32 = arith.constant 0 : i32
    %c0_i32_0 = arith.constant 0 : i32
    %c0_i32_1 = arith.constant 0 : i32
    return %c0_i32, %c0_i32_0 : i32, i32
  }
  func.func @transform_13(%arg0: i32) -> (i32, i32) {
    %c0_i32 = arith.constant 0 : i32
    %c0_i32_0 = arith.constant 0 : i32
    %c0_i32_1 = arith.constant 0 : i32
    return %c0_i32, %c0_i32_0 : i32, i32
  }
  func.func @transform_14(%arg0: i32) -> (i32, i32) {
    %c0_i32 = arith.constant 0 : i32
    %c0_i32_0 = arith.constant 0 : i32
    %c0_i32_1 = arith.constant 0 : i32
    return %c0_i32, %c0_i32_0 : i32, i32
  }
  func.func @transform_15(%arg0: i32) -> (i32, i32) {
    %c0_i32 = arith.constant 0 : i32
    %c0_i32_0 = arith.constant 0 : i32
    %c0_i32_1 = arith.constant 0 : i32
    return %c0_i32, %c0_i32_0 : i32, i32
  }
  func.func @transform_16(%arg0: i32) -> (i32, i32) {
    %c0_i32 = arith.constant 0 : i32
    %c0_i32_0 = arith.constant 0 : i32
    %c0_i32_1 = arith.constant 0 : i32
    return %c0_i32, %c0_i32_0 : i32, i32
  }
  func.func @transform_17(%arg0: i32) -> (i32, i32) {
    %c0_i32 = arith.constant 0 : i32
    %c0_i32_0 = arith.constant 0 : i32
    %c0_i32_1 = arith.constant 0 : i32
    return %c0_i32, %c0_i32_0 : i32, i32
  }
  func.func @transform_18(%arg0: i32) -> (i32, i32) {
    %c0_i32 = arith.constant 0 : i32
    %c0_i32_0 = arith.constant 0 : i32
    return %arg0, %c0_i32 : i32, i32
  }
}

</mosaic_0001>

<llo_original>
// kernel: tpu_custom_call.1
$region0: #{tpu_custom_call.1}
  #allocation0 [shape = 'u32[]', space=smem, size = 0x4, offset = 0x4, fixed_abs, tag = 'smem constant byte address 0x4 - core index']
  #allocation1 [shape = 'u32[144,128]{1,0:T(1,128)}', space=vmem, size = 0x12000, scoped, tag = 'internal scratch']
  #allocation2 [shape = 'f32[16,32]{1,0:T(8,128)}', space=vmem, size = 0x2000, scoped, tag = 'scratch operand']
  %s0 = inlined_call_operand.hbm [shape: bf16[16,32], index: 0, kind: input, shape index: {}]
  %s1 = inlined_call_operand.vmem [shape: bf16[32,32], index: 1, kind: input, shape index: {}]
  %s2 = inlined_call_operand.vmem [shape: bf16[32,32], index: 2, kind: input, shape index: {}]
  %s3 = inlined_call_operand.vmem [shape: bf16[32,32], index: 3, kind: input, shape index: {}]
  %s4 = inlined_call_operand.vmem [shape: bf16[32,32], index: 4, kind: input, shape index: {}]
  %s5 = inlined_call_operand.vmem [shape: f32[1,32], index: 5, kind: input, shape index: {}]
  %s6 = inlined_call_operand.vmem [shape: f32[1,32], index: 6, kind: input, shape index: {}]
  %s7 = inlined_call_operand.hbm [shape: f32[1,32], index: 7, kind: input, shape index: {}]
  %s8 = inlined_call_operand.vmem [shape: bf16[4,8,32], index: 8, kind: input, shape index: {}]
  %s9 = inlined_call_operand.hbm [shape: f32[1,32], index: 9, kind: input, shape index: {}]
  %s10 = inlined_call_operand.vmem [shape: f32[1,32], index: 10, kind: input, shape index: {}]
  %s11 = inlined_call_operand.vmem [shape: f32[1,32], index: 11, kind: input, shape index: {}]
  %s12 = inlined_call_operand.vmem [shape: f32[1,32], index: 12, kind: input, shape index: {}]
  %s13 = inlined_call_operand.vmem [shape: f32[1,32], index: 13, kind: input, shape index: {}]
  %s14 = inlined_call_operand.vmem [shape: bf16[32,128], index: 14, kind: input, shape index: {}]
  %s15 = inlined_call_operand.vmem [shape: f32[1,128], index: 15, kind: input, shape index: {}]
  %s16 = inlined_call_operand.vmem [shape: bf16[128,32], index: 16, kind: input, shape index: {}]
  %s17 = inlined_call_operand.vmem [shape: f32[1,32], index: 17, kind: input, shape index: {}]
  %s18 = inlined_call_operand.hbm [shape: bf16[16,32], index: 18, kind: output, shape index: {}]
  %s19 = sld [smem:[#allocation0]]
  $region94: #{tpu_custom_call.1} parent=0
    _
  %s21 = ssub.s32 1, %s19
  %s22 = scalar_select 0, %s21, %s19
  $region1: #{tpu_custom_call.1} parent=0
    #allocation3 [shape = 'u8[4096]{0}', space=vmem, size = 0x1000, scoped, tag = 'input window, operand 0, single buffered']
    #allocation4 [shape = 's32[1]{0}', space=sflag, size = 0x4, scoped, tag = 'scoped memory for tpu_custom_call.1']
    #allocation5 [shape = 's32[1]{0}', space=sflag, size = 0x4, scoped, tag = 'scoped memory for tpu_custom_call.1']
    #allocation6 [shape = 'u8[512]{0}', space=vmem, size = 0x400, scoped, tag = 'input window, operand 7, single buffered']
    #allocation7 [shape = 's32[1]{0}', space=sflag, size = 0x4, scoped, tag = 'scoped memory for tpu_custom_call.1']
    #allocation8 [shape = 'u8[512]{0}', space=vmem, size = 0x400, scoped, tag = 'input window, operand 9, single buffered']
    #allocation9 [shape = 'u8[4096]{0}', space=vmem, size = 0x1000, scoped, tag = 'output window, operand 0, single buffered']
    %23 = vsyncpa [#allocation4], 0
    %24 = vsyncpa [#allocation7], 0
    %25 = vsyncpa [#allocation5], 0
    // Predicated region
    $region2: #{tpu_custom_call.1} parent=1 // pred_check
      _
    $region3: #{tpu_custom_call.1} parent=1 // pred_check_branch
      %27 = sbr.rel (0) target = $region5
    $region4: #{tpu_custom_call.1} parent=1 // pred_region
      %s29 = ssub.s32 128, 128
      %30 = vsyncadd [#allocation4], %s29
      %s31 = sshll.u32 [#allocation3], 4
      %s32 = int_to_ptr.vmem [resolvable:$true] %s31
      %37 = dma.hbm_to_vmem [thread:$0]  %s0, 128, %s32, [#allocation4], 64, 64, 4
    $region5: #{tpu_custom_call.1} parent=1 // pred_fallthru
      _
    // Predicated region
    $region6: #{tpu_custom_call.1} parent=1 // pred_check
      _
    $region7: #{tpu_custom_call.1} parent=1 // pred_check_branch
      %39 = sbr.rel (0) target = $region9
    $region8: #{tpu_custom_call.1} parent=1 // pred_region
      _
    $region9: #{tpu_custom_call.1} parent=1 // pred_fallthru
      _
    // Predicated region
    $region10: #{tpu_custom_call.1} parent=1 // pred_check
      _
    $region11: #{tpu_custom_call.1} parent=1 // pred_check_branch
      %41 = sbr.rel (0) target = $region13
    $region12: #{tpu_custom_call.1} parent=1 // pred_region
      _
    $region13: #{tpu_custom_call.1} parent=1 // pred_fallthru
      _
    // Predicated region
    $region14: #{tpu_custom_call.1} parent=1 // pred_check
      _
    $region15: #{tpu_custom_call.1} parent=1 // pred_check_branch
      %43 = sbr.rel (0) target = $region17
    $region16: #{tpu_custom_call.1} parent=1 // pred_region
      _
    $region17: #{tpu_custom_call.1} parent=1 // pred_fallthru
      _
    // Predicated region
    $region18: #{tpu_custom_call.1} parent=1 // pred_check
      _
    $region19: #{tpu_custom_call.1} parent=1 // pred_check_branch
      %45 = sbr.rel (0) target = $region21
    $region20: #{tpu_custom_call.1} parent=1 // pred_region
      _
    $region21: #{tpu_custom_call.1} parent=1 // pred_fallthru
      _
    // Predicated region
    $region22: #{tpu_custom_call.1} parent=1 // pred_check
      _
    $region23: #{tpu_custom_call.1} parent=1 // pred_check_branch
      %47 = sbr.rel (0) target = $region25
    $region24: #{tpu_custom_call.1} parent=1 // pred_region
      _
    $region25: #{tpu_custom_call.1} parent=1 // pred_fallthru
      _
    // Predicated region
    $region26: #{tpu_custom_call.1} parent=1 // pred_check
      _
    $region27: #{tpu_custom_call.1} parent=1 // pred_check_branch
      %49 = sbr.rel (0) target = $region29
    $region28: #{tpu_custom_call.1} parent=1 // pred_region
      _
    $region29: #{tpu_custom_call.1} parent=1 // pred_fallthru
      _
    // Predicated region
    $region30: #{tpu_custom_call.1} parent=1 // pred_check
      _
    $region31: #{tpu_custom_call.1} parent=1 // pred_check_branch
      %51 = sbr.rel (0) target = $region33
    $region32: #{tpu_custom_call.1} parent=1 // pred_region
      %s53 = ssub.s32 16, 16
      %54 = vsyncadd [#allocation7], %s53
      %s56 = sshll.u32 [#allocation6], 4
      %s57 = int_to_ptr.vmem [resolvable:$true] %s56
      %59 = dma.hbm_to_vmem [thread:$0]  %s7, 16, %s57, [#allocation7]
    $region33: #{tpu_custom_call.1} parent=1 // pred_fallthru
      _
    // Predicated region
    $region34: #{tpu_custom_call.1} parent=1 // pred_check
      _
    $region35: #{tpu_custom_call.1} parent=1 // pred_check_branch
      %61 = sbr.rel (0) target = $region37
    $region36: #{tpu_custom_call.1} parent=1 // pred_region
      _
    $region37: #{tpu_custom_call.1} parent=1 // pred_fallthru
      _
    // Predicated region
    $region38: #{tpu_custom_call.1} parent=1 // pred_check
      _
    $region39: #{tpu_custom_call.1} parent=1 // pred_check_branch
      %63 = sbr.rel (0) target = $region41
    $region40: #{tpu_custom_call.1} parent=1 // pred_region
      %s65 = ssub.s32 16, 16
      %66 = vsyncadd [#allocation7], %s65
      %s68 = sshll.u32 [#allocation8], 4
      %s69 = int_to_ptr.vmem [resolvable:$true] %s68
      %71 = dma.hbm_to_vmem [thread:$0]  %s9, 16, %s69, [#allocation7]
    $region41: #{tpu_custom_call.1} parent=1 // pred_fallthru
      _
    // Predicated region
    $region42: #{tpu_custom_call.1} parent=1 // pred_check
      _
    $region43: #{tpu_custom_call.1} parent=1 // pred_check_branch
      %73 = sbr.rel (0) target = $region45
    $region44: #{tpu_custom_call.1} parent=1 // pred_region
      _
    $region45: #{tpu_custom_call.1} parent=1 // pred_fallthru
      _
    // Predicated region
    $region46: #{tpu_custom_call.1} parent=1 // pred_check
      _
    $region47: #{tpu_custom_call.1} parent=1 // pred_check_branch
      %75 = sbr.rel (0) target = $region49
    $region48: #{tpu_custom_call.1} parent=1 // pred_region
      _
    $region49: #{tpu_custom_call.1} parent=1 // pred_fallthru
      _
    // Predicated region
    $region50: #{tpu_custom_call.1} parent=1 // pred_check
      _
    $region51: #{tpu_custom_call.1} parent=1 // pred_check_branch
      %77 = sbr.rel (0) target = $region53
    $region52: #{tpu_custom_call.1} parent=1 // pred_region
      _
    $region53: #{tpu_custom_call.1} parent=1 // pred_fallthru
      _
    // Predicated region
    $region54: #{tpu_custom_call.1} parent=1 // pred_check
      _
    $region55: #{tpu_custom_call.1} parent=1 // pred_check_branch
      %79 = sbr.rel (0) target = $region57
    $region56: #{tpu_custom_call.1} parent=1 // pred_region
      _
    $region57: #{tpu_custom_call.1} parent=1 // pred_fallthru
      _
    // Predicated region
    $region58: #{tpu_custom_call.1} parent=1 // pred_check
      _
    $region59: #{tpu_custom_call.1} parent=1 // pred_check_branch
      %81 = sbr.rel (0) target = $region61
    $region60: #{tpu_custom_call.1} parent=1 // pred_region
      _
    $region61: #{tpu_custom_call.1} parent=1 // pred_fallthru
      _
    // Predicated region
    $region62: #{tpu_custom_call.1} parent=1 // pred_check
      _
    $region63: #{tpu_custom_call.1} parent=1 // pred_check_branch
      %83 = sbr.rel (0) target = $region65
    $region64: #{tpu_custom_call.1} parent=1 // pred_region
      _
    $region65: #{tpu_custom_call.1} parent=1 // pred_fallthru
      _
    // Predicated region
    $region66: #{tpu_custom_call.1} parent=1 // pred_check
      _
    $region67: #{tpu_custom_call.1} parent=1 // pred_check_branch
      %85 = sbr.rel (0) target = $region69
    $region68: #{tpu_custom_call.1} parent=1 // pred_region
      _
    $region69: #{tpu_custom_call.1} parent=1 // pred_fallthru
      _
    // Predicated region
    $region70: #{tpu_custom_call.1} parent=1 // pred_check
      _
    $region71: #{tpu_custom_call.1} parent=1 // pred_check_branch
      %87 = sbr.rel (0) target = $region73
    $region72: #{tpu_custom_call.1} parent=1 // pred_region
      _
    $region73: #{tpu_custom_call.1} parent=1 // pred_fallthru
      _
    // Predicated region
    $region74: #{tpu_custom_call.1} parent=1 // pred_check
      _
    $region75: #{tpu_custom_call.1} parent=1 // pred_check_branch
      %89 = sbr.rel (0) target = $region77
    $region76: #{tpu_custom_call.1} parent=1 // pred_region
      %90 = dma.done [#allocation4], 128
    $region77: #{tpu_custom_call.1} parent=1 // pred_fallthru
      _
    // Predicated region
    $region78: #{tpu_custom_call.1} parent=1 // pred_check
      _
    $region79: #{tpu_custom_call.1} parent=1 // pred_check_branch
      %92 = sbr.rel (0) target = $region81
    $region80: #{tpu_custom_call.1} parent=1 // pred_region
      %93 = dma.done [#allocation7], 16
    $region81: #{tpu_custom_call.1} parent=1 // pred_fallthru
      _
    // Predicated region
    $region82: #{tpu_custom_call.1} parent=1 // pred_check
      _
    $region83: #{tpu_custom_call.1} parent=1 // pred_check_branch
      %95 = sbr.rel (0) target = $region85
    $region84: #{tpu_custom_call.1} parent=1 // pred_region
      %96 = dma.done [#allocation7], 16
    $region85: #{tpu_custom_call.1} parent=1 // pred_fallthru
      _
    %v98 = vld [vmem:[#allocation3] sm:$0xf]
    %v99 = vld [vmem:[#allocation3 + $0x4] sm:$0xf]
    %v100 = vld [vmem:[%s1] sm:$0xf]
    %v101 = vld [vmem:[%s1 + $0x4] sm:$0xf]
    %v102 = vld [vmem:[%s1 + $0x8] sm:$0xf]
    %v103 = vld [vmem:[%s1 + $0xc] sm:$0xf]
    %v104 = vld [vmem:[%s2] sm:$0xf]
    %v105 = vld [vmem:[%s2 + $0x4] sm:$0xf]
    %v106 = vld [vmem:[%s2 + $0x8] sm:$0xf]
    %v107 = vld [vmem:[%s2 + $0xc] sm:$0xf]
    %v108 = vld [vmem:[%s5] sm:$0x1]
    %v110 = vlaneseq
    %v111 = vshrl.u32 %v110, 7
    %v112 = vsub.s32 0, %v111
    %v113 = vrot.slane %v108, %v112
    %v117 = vunpack.c.l.b16 %v98
    %v118 = vunpack.c.l.b16 %v99
    %v119 = vpack.c.b16 %v118, %v117
    %v124 = vunpack.c.l.b16 %v104
    %v125 = vunpack.c.l.b16 %v105
    %v126 = vunpack.c.l.b16 %v106
    %v127 = vunpack.c.l.b16 %v107
    %v128 = vpack.c.b16 %v125, %v124
    %v129 = vpack.c.b16 %v127, %v126
    %vm132 = vcmask 261120
    %v134 = vsel %vm132, %v119, 0
    %136 = vmatprep.subr.bf16.mxu0 0
    %137 = vmatpush1.bf16.msra.mxu0 %v128
    %138 = vmatprep.subr.bf16.mxu0 0
    %139 = vmatpush1.bf16.msra.mxu0 %v129
    %140 = vmatprep.subr.bf16.mxu0 0
    %141 = vmatpush1.bf16.msra.mxu0 0
    %142 = vmatprep.subr.bf16.mxu0 0
    %143 = vmatpush1.bf16.msra.mxu0 0
    %144 = vmatprep.subr.bf16.mxu0 0
    %145 = vmatpush1.bf16.msra.mxu0 0
    %146 = vmatprep.subr.bf16.mxu0 0
    %147 = vmatpush1.bf16.msra.mxu0 0
    %148 = vmatprep.subr.bf16.mxu0 0
    %149 = vmatpush1.bf16.msra.mxu0 0
    %150 = vmatprep.subr.bf16.mxu0 0
    %151 = vmatpush1.bf16.msra.mxu0 0
    %152 = vmatprep.subr.bf16.mxu0 0
    %153 = vmatpush1.bf16.msra.mxu0 0
    %154 = vmatprep.subr.bf16.mxu0 0
    %155 = vmatpush1.bf16.msra.mxu0 0
    %156 = vmatprep.subr.bf16.mxu0 0
    %157 = vmatpush1.bf16.msra.mxu0 0
    %158 = vmatprep.subr.bf16.mxu0 0
    %159 = vmatpush1.bf16.msra.mxu0 0
    %160 = vmatprep.subr.bf16.mxu0 0
    %161 = vmatpush1.bf16.msra.mxu0 0
    %162 = vmatprep.subr.bf16.mxu0 0
    %163 = vmatpush1.bf16.msra.mxu0 0
    %164 = vmatprep.subr.bf16.mxu0 0
    %165 = vmatpush1.bf16.msra.mxu0 0
    %166 = vmatprep.subr.bf16.mxu0 0
    %167 = vmatpush1.bf16.msra.mxu0 0
    %168 = vmatprep.mubr.bf16.mxu0 0
    %169 = vmatmul.mubr.bf16.gmra.mrb[0].mxu0 %v134
    %v170 = vpop.f32.mrb[0].mxu0
    %v171 = vadd.f32 %v113, %v170
    %v172 = vpop.f32.mrb[0].mxu0
    %v173 = vpop.f32.mrb[0].mxu0
    %v174 = vadd.f32 %v113, %v173
    %v175 = vpop.f32.mrb[0].mxu0
    %176 = vdwg.mxu0
    %v177 = vmul.f32 %v171, 0.35355338
    %v178 = vmul.f32 %v174, 0.35355338
    %v179 = vld [vmem:[%s3] sm:$0xf]
    %v180 = vld [vmem:[%s3 + $0x4] sm:$0xf]
    %v181 = vld [vmem:[%s3 + $0x8] sm:$0xf]
    %v182 = vld [vmem:[%s3 + $0xc] sm:$0xf]
    %v183 = vld [vmem:[%s6] sm:$0x1]
    %v185 = vlaneseq
    %v186 = vshrl.u32 %v185, 7
    %v187 = vsub.s32 0, %v186
    %v188 = vrot.slane %v183, %v187
    %v194 = vunpack.c.l.b16 %v100
    %v195 = vunpack.c.l.b16 %v101
    %v196 = vunpack.c.l.b16 %v102
    %v197 = vunpack.c.l.b16 %v103
    %v198 = vpack.c.b16 %v195, %v194
    %v199 = vpack.c.b16 %v197, %v196
    %v204 = vunpack.c.l.b16 %v179
    %v205 = vunpack.c.l.b16 %v180
    %v206 = vunpack.c.l.b16 %v181
    %v207 = vunpack.c.l.b16 %v182
    %v208 = vpack.c.b16 %v205, %v204
    %v209 = vpack.c.b16 %v207, %v206
    %v213 = vsel %vm132, %v198, 0
    %v216 = vsel %vm132, %v199, 0
    %218 = vmatprep.subr.bf16.mxu0 0
    %219 = vmatpush1.bf16.msra.mxu0 %v208
    %220 = vmatprep.subr.bf16.mxu0 0
    %221 = vmatpush1.bf16.msra.mxu0 %v209
    %222 = vmatprep.subr.bf16.mxu0 0
    %223 = vmatpush1.bf16.msra.mxu0 0
    %224 = vmatprep.subr.bf16.mxu0 0
    %225 = vmatpush1.bf16.msra.mxu0 0
    %226 = vmatprep.subr.bf16.mxu0 0
    %227 = vmatpush1.bf16.msra.mxu0 0
    %228 = vmatprep.subr.bf16.mxu0 0
    %229 = vmatpush1.bf16.msra.mxu0 0
    %230 = vmatprep.subr.bf16.mxu0 0
    %231 = vmatpush1.bf16.msra.mxu0 0
    %232 = vmatprep.subr.bf16.mxu0 0
    %233 = vmatpush1.bf16.msra.mxu0 0
    %234 = vmatprep.subr.bf16.mxu0 0
    %235 = vmatpush1.bf16.msra.mxu0 0
    %236 = vmatprep.subr.bf16.mxu0 0
    %237 = vmatpush1.bf16.msra.mxu0 0
    %238 = vmatprep.subr.bf16.mxu0 0
    %239 = vmatpush1.bf16.msra.mxu0 0
    %240 = vmatprep.subr.bf16.mxu0 0
    %241 = vmatpush1.bf16.msra.mxu0 0
    %242 = vmatprep.subr.bf16.mxu0 0
    %243 = vmatpush1.bf16.msra.mxu0 0
    %244 = vmatprep.subr.bf16.mxu0 0
    %245 = vmatpush1.bf16.msra.mxu0 0
    %246 = vmatprep.subr.bf16.mxu0 0
    %247 = vmatpush1.bf16.msra.mxu0 0
    %248 = vmatprep.subr.bf16.mxu0 0
    %249 = vmatpush1.bf16.msra.mxu0 0
    %250 = vmatprep.mubr.bf16.mxu0 0
    %251 = vmatmul.mubr.bf16.gmra.mrb[0].mxu0 %v213
    %v252 = vpop.f32.mrb[0].mxu0
    %v253 = vadd.f32 %v188, %v252
    %v254 = vpop.f32.mrb[0].mxu0
    %v255 = vpop.f32.mrb[0].mxu0
    %v256 = vadd.f32 %v188, %v255
    %v257 = vpop.f32.mrb[0].mxu0
    %258 = vmatprep.mubr.bf16.mxu0 0
    %259 = vmatmul.mubr.bf16.gmra.mrb[0].mxu0 %v216
    %v260 = vpop.f32.mrb[0].mxu0
    %v261 = vadd.f32 %v188, %v260
    %v262 = vpop.f32.mrb[0].mxu0
    %v263 = vpop.f32.mrb[0].mxu0
    %v264 = vadd.f32 %v188, %v263
    %v265 = vpop.f32.mrb[0].mxu0
    %266 = vdwg.mxu0
    %v267 = vld [vmem:[%s4] sm:$0xf]
    %v268 = vld [vmem:[%s4 + $0x4] sm:$0xf]
    %v269 = vld [vmem:[%s4 + $0x8] sm:$0xf]
    %v270 = vld [vmem:[%s4 + $0xc] sm:$0xf]
    %v271 = vld [vmem:[#allocation6] sm:$0x1]
    %v273 = vlaneseq
    %v274 = vshrl.u32 %v273, 7
    %v275 = vsub.s32 0, %v274
    %v276 = vrot.slane %v271, %v275
    %v282 = vunpack.c.l.b16 %v267
    %v283 = vunpack.c.l.b16 %v268
    %v284 = vunpack.c.l.b16 %v269
    %v285 = vunpack.c.l.b16 %v270
    %v286 = vpack.c.b16 %v283, %v282
    %v287 = vpack.c.b16 %v285, %v284
    %290 = vmatprep.subr.bf16.mxu0 0
    %291 = vmatpush1.bf16.msra.mxu0 %v286
    %292 = vmatprep.subr.bf16.mxu0 0
    %293 = vmatpush1.bf16.msra.mxu0 %v287
    %294 = vmatprep.subr.bf16.mxu0 0
    %295 = vmatpush1.bf16.msra.mxu0 0
    %296 = vmatprep.subr.bf16.mxu0 0
    %297 = vmatpush1.bf16.msra.mxu0 0
    %298 = vmatprep.subr.bf16.mxu0 0
    %299 = vmatpush1.bf16.msra.mxu0 0
    %300 = vmatprep.subr.bf16.mxu0 0
    %301 = vmatpush1.bf16.msra.mxu0 0
    %302 = vmatprep.subr.bf16.mxu0 0
    %303 = vmatpush1.bf16.msra.mxu0 0
    %304 = vmatprep.subr.bf16.mxu0 0
    %305 = vmatpush1.bf16.msra.mxu0 0
    %306 = vmatprep.subr.bf16.mxu0 0
    %307 = vmatpush1.bf16.msra.mxu0 0
    %308 = vmatprep.subr.bf16.mxu0 0
    %309 = vmatpush1.bf16.msra.mxu0 0
    %310 = vmatprep.subr.bf16.mxu0 0
    %311 = vmatpush1.bf16.msra.mxu0 0
    %312 = vmatprep.subr.bf16.mxu0 0
    %313 = vmatpush1.bf16.msra.mxu0 0
    %314 = vmatprep.subr.bf16.mxu0 0
    %315 = vmatpush1.bf16.msra.mxu0 0
    %316 = vmatprep.subr.bf16.mxu0 0
    %317 = vmatpush1.bf16.msra.mxu0 0
    %318 = vmatprep.subr.bf16.mxu0 0
    %319 = vmatpush1.bf16.msra.mxu0 0
    %320 = vmatprep.subr.bf16.mxu0 0
    %321 = vmatpush1.bf16.msra.mxu0 0
    %322 = vmatprep.mubr.bf16.mxu0 0
    %323 = vmatmul.mubr.bf16.gmra.mrb[0].mxu0 %v213
    %v324 = vpop.f32.mrb[0].mxu0
    %v325 = vadd.f32 %v276, %v324
    %v326 = vpop.f32.mrb[0].mxu0
    %v327 = vpop.f32.mrb[0].mxu0
    %v328 = vadd.f32 %v276, %v327
    %v329 = vpop.f32.mrb[0].mxu0
    %330 = vmatprep.mubr.bf16.mxu0 0
    %331 = vmatmul.mubr.bf16.gmra.mrb[0].mxu0 %v216
    %v332 = vpop.f32.mrb[0].mxu0
    %v333 = vadd.f32 %v276, %v332
    %v334 = vpop.f32.mrb[0].mxu0
    %v335 = vpop.f32.mrb[0].mxu0
    %v336 = vadd.f32 %v276, %v335
    %v337 = vpop.f32.mrb[0].mxu0
    %338 = vdwg.mxu0
    %v339 = vpack.c.bf16 %v177, %v177
    %v340 = vpack.c.bf16 %v256, %v253
    %v341 = vpack.c.bf16 %v328, %v325
    %vm342 = vcmask 64512
    %v344 = vsel %vm342, %v339, 0
    %v347 = vsel %vm342, %v340, 0
    %349 = vmatprep.subr.bf16.mxu0 0
    %350 = vmatpush1.bf16.xpose.msra.mxu0 %v347
    %351 = vmatprep.subr.bf16.mxu0 0
    %352 = vmatpush1.bf16.xpose.msra.mxu0 0
    %353 = vmatprep.subr.bf16.mxu0 0
    %354 = vmatpush1.bf16.xpose.msra.mxu0 0
    %355 = vmatprep.subr.bf16.mxu0 0
    %356 = vmatpush1.bf16.xpose.msra.mxu0 0
    %357 = vmatprep.subr.bf16.mxu0 0
    %358 = vmatpush1.bf16.xpose.msra.mxu0 0
    %359 = vmatprep.subr.bf16.mxu0 0
    %360 = vmatpush1.bf16.xpose.msra.mxu0 0
    %361 = vmatprep.subr.bf16.mxu0 0
    %362 = vmatpush1.bf16.xpose.msra.mxu0 0
    %363 = vmatprep.subr.bf16.mxu0 0
    %364 = vmatpush1.bf16.xpose.msra.mxu0 0
    %365 = vmatprep.subr.bf16.mxu0 0
    %366 = vmatpush1.bf16.xpose.msra.mxu0 0
    %367 = vmatprep.subr.bf16.mxu0 0
    %368 = vmatpush1.bf16.xpose.msra.mxu0 0
    %369 = vmatprep.subr.bf16.mxu0 0
    %370 = vmatpush1.bf16.xpose.msra.mxu0 0
    %371 = vmatprep.subr.bf16.mxu0 0
    %372 = vmatpush1.bf16.xpose.msra.mxu0 0
    %373 = vmatprep.subr.bf16.mxu0 0
    %374 = vmatpush1.bf16.xpose.msra.mxu0 0
    %375 = vmatprep.subr.bf16.mxu0 0
    %376 = vmatpush1.bf16.xpose.msra.mxu0 0
    %377 = vmatprep.subr.bf16.mxu0 0
    %378 = vmatpush1.bf16.xpose.msra.mxu0 0
    %379 = vmatprep.subr.bf16.mxu0 0
    %380 = vmatpush1.bf16.xpose.msra.mxu0 0
    %381 = vmatprep.mubr.bf16.mxu0 0
    %382 = vmatmul.mubr.bf16.gmra.mrb[0].mxu0 %v344
    %v383 = vpop.f32.mrb[0].mxu0
    %v384 = vadd.f32 0.0, %v383
    %v385 = vpop.f32.mrb[0].mxu0
    %v386 = vpop.f32.mrb[0].mxu0
    %v387 = vpop.f32.mrb[0].mxu0
    %388 = vdwg.mxu0
    %vm389 = vcmask 130048
    %v390 = vsel %vm389, %v384, -inf
    %391 = vmax.xlane.f32.xlu0 %v390
    %v392 = vpop.xlane.xlu0 %391
    %v393 = vsub.f32 %v384, %v392
    %v394 = vmul.f32 %v393, 1.442695
    %v395 = vpow.pop %v394
    %v396 = vsel %vm389, %v395, 0.0
    %397 = vadd.xlane.f32.xlu0 %v396
    %v398 = vpop.xlane.xlu0 %397
    %v399 = vpack.c.bf16 %v395, %v395
    %v401 = vsel %vm389, %v399, 0
    %403 = vmatprep.subr.bf16.mxu0 0
    %404 = vmatpush1.bf16.msra.mxu0 %v341
    %405 = vmatprep.subr.bf16.mxu0 0
    %406 = vmatpush1.bf16.msra.mxu0 0
    %407 = vmatprep.subr.bf16.mxu0 0
    %408 = vmatpush1.bf16.msra.mxu0 0
    %409 = vmatprep.subr.bf16.mxu0 0
    %410 = vmatpush1.bf16.msra.mxu0 0
    %411 = vmatprep.subr.bf16.mxu0 0
    %412 = vmatpush1.bf16.msra.mxu0 0
    %413 = vmatprep.subr.bf16.mxu0 0
    %414 = vmatpush1.bf16.msra.mxu0 0
    %415 = vmatprep.subr.bf16.mxu0 0
    %416 = vmatpush1.bf16.msra.mxu0 0
    %417 = vmatprep.subr.bf16.mxu0 0
    %418 = vmatpush1.bf16.msra.mxu0 0
    %419 = vmatprep.subr.bf16.mxu0 0
    %420 = vmatpush1.bf16.msra.mxu0 0
    %421 = vmatprep.subr.bf16.mxu0 0
    %422 = vmatpush1.bf16.msra.mxu0 0
    %423 = vmatprep.subr.bf16.mxu0 0
    %424 = vmatpush1.bf16.msra.mxu0 0
    %425 = vmatprep.subr.bf16.mxu0 0
    %426 = vmatpush1.bf16.msra.mxu0 0
    %427 = vmatprep.subr.bf16.mxu0 0
    %428 = vmatpush1.bf16.msra.mxu0 0
    %429 = vmatprep.subr.bf16.mxu0 0
    %430 = vmatpush1.bf16.msra.mxu0 0
    %431 = vmatprep.subr.bf16.mxu0 0
    %432 = vmatpush1.bf16.msra.mxu0 0
    %433 = vmatprep.subr.bf16.mxu0 0
    %434 = vmatpush1.bf16.msra.mxu0 0
    %435 = vmatprep.mubr.bf16.mxu0 0
    %436 = vmatmul.mubr.bf16.gmra.mrb[0].mxu0 %v401
    %v437 = vpop.f32.mrb[0].mxu0
    %v438 = vadd.f32 0.0, %v437
    %v439 = vpop.f32.mrb[0].mxu0
    %v440 = vpop.f32.mrb[0].mxu0
    %v441 = vpop.f32.mrb[0].mxu0
    %442 = vdwg.mxu0
    %v443 = vrcp.pop %v398
    %v444 = vmul.f32 %v438, %v443
    %v445 = vpack.c.bf16 %v444, %v444
    %v446 = vld [vmem:[%s8] sm:$0xf]
    %448 = vrot.lane.b32.xlu0 %v339, 120
    %v449 = vpop.permute.xlu0 %448
    %451 = vrot.lane.b32.xlu0 %v340, 120
    %v452 = vpop.permute.xlu0 %451
    %v454 = vsel %vm342, %v449, 0
    %v457 = vsel %vm342, %v452, 0
    %459 = vmatprep.subr.bf16.mxu0 0
    %460 = vmatpush1.bf16.xpose.msra.mxu0 %v457
    %461 = vmatprep.subr.bf16.mxu0 0
    %462 = vmatpush1.bf16.xpose.msra.mxu0 0
    %463 = vmatprep.subr.bf16.mxu0 0
    %464 = vmatpush1.bf16.xpose.msra.mxu0 0
    %465 = vmatprep.subr.bf16.mxu0 0
    %466 = vmatpush1.bf16.xpose.msra.mxu0 0
    %467 = vmatprep.subr.bf16.mxu0 0
    %468 = vmatpush1.bf16.xpose.msra.mxu0 0
    %469 = vmatprep.subr.bf16.mxu0 0
    %470 = vmatpush1.bf16.xpose.msra.mxu0 0
    %471 = vmatprep.subr.bf16.mxu0 0
    %472 = vmatpush1.bf16.xpose.msra.mxu0 0
    %473 = vmatprep.subr.bf16.mxu0 0
    %474 = vmatpush1.bf16.xpose.msra.mxu0 0
    %475 = vmatprep.subr.bf16.mxu0 0
    %476 = vmatpush1.bf16.xpose.msra.mxu0 0
    %477 = vmatprep.subr.bf16.mxu0 0
    %478 = vmatpush1.bf16.xpose.msra.mxu0 0
    %479 = vmatprep.subr.bf16.mxu0 0
    %480 = vmatpush1.bf16.xpose.msra.mxu0 0
    %481 = vmatprep.subr.bf16.mxu0 0
    %482 = vmatpush1.bf16.xpose.msra.mxu0 0
    %483 = vmatprep.subr.bf16.mxu0 0
    %484 = vmatpush1.bf16.xpose.msra.mxu0 0
    %485 = vmatprep.subr.bf16.mxu0 0
    %486 = vmatpush1.bf16.xpose.msra.mxu0 0
    %487 = vmatprep.subr.bf16.mxu0 0
    %488 = vmatpush1.bf16.xpose.msra.mxu0 0
    %489 = vmatprep.subr.bf16.mxu0 0
    %490 = vmatpush1.bf16.xpose.msra.mxu0 0
    %491 = vmatprep.mubr.bf16.mxu0 0
    %492 = vmatmul.mubr.bf16.gmra.mrb[0].mxu0 %v454
    %v493 = vpop.f32.mrb[0].mxu0
    %v494 = vadd.f32 0.0, %v493
    %v495 = vpop.f32.mrb[0].mxu0
    %v496 = vpop.f32.mrb[0].mxu0
    %v497 = vpop.f32.mrb[0].mxu0
    %498 = vdwg.mxu0
    %v499 = vsel %vm389, %v494, -inf
    %500 = vmax.xlane.f32.xlu0 %v499
    %v501 = vpop.xlane.xlu0 %500
    %v502 = vsub.f32 %v494, %v501
    %v503 = vmul.f32 %v502, 1.442695
    %v504 = vpow.pop %v503
    %v505 = vsel %vm389, %v504, 0.0
    %506 = vadd.xlane.f32.xlu0 %v505
    %v507 = vpop.xlane.xlu0 %506
    %v508 = vpack.c.bf16 %v504, %v504
    %510 = vrot.lane.b32.xlu0 %v341, 120
    %v511 = vpop.permute.xlu0 %510
    %v514 = vsel %vm389, %v508, 0
    %516 = vmatprep.subr.bf16.mxu0 0
    %517 = vmatpush1.bf16.msra.mxu0 %v511
    %518 = vmatprep.subr.bf16.mxu0 0
    %519 = vmatpush1.bf16.msra.mxu0 0
    %520 = vmatprep.subr.bf16.mxu0 0
    %521 = vmatpush1.bf16.msra.mxu0 0
    %522 = vmatprep.subr.bf16.mxu0 0
    %523 = vmatpush1.bf16.msra.mxu0 0
    %524 = vmatprep.subr.bf16.mxu0 0
    %525 = vmatpush1.bf16.msra.mxu0 0
    %526 = vmatprep.subr.bf16.mxu0 0
    %527 = vmatpush1.bf16.msra.mxu0 0
    %528 = vmatprep.subr.bf16.mxu0 0
    %529 = vmatpush1.bf16.msra.mxu0 0
    %530 = vmatprep.subr.bf16.mxu0 0
    %531 = vmatpush1.bf16.msra.mxu0 0
    %532 = vmatprep.subr.bf16.mxu0 0
    %533 = vmatpush1.bf16.msra.mxu0 0
    %534 = vmatprep.subr.bf16.mxu0 0
    %535 = vmatpush1.bf16.msra.mxu0 0
    %536 = vmatprep.subr.bf16.mxu0 0
    %537 = vmatpush1.bf16.msra.mxu0 0
    %538 = vmatprep.subr.bf16.mxu0 0
    %539 = vmatpush1.bf16.msra.mxu0 0
    %540 = vmatprep.subr.bf16.mxu0 0
    %541 = vmatpush1.bf16.msra.mxu0 0
    %542 = vmatprep.subr.bf16.mxu0 0
    %543 = vmatpush1.bf16.msra.mxu0 0
    %544 = vmatprep.subr.bf16.mxu0 0
    %545 = vmatpush1.bf16.msra.mxu0 0
    %546 = vmatprep.subr.bf16.mxu0 0
    %547 = vmatpush1.bf16.msra.mxu0 0
    %548 = vmatprep.mubr.bf16.mxu0 0
    %549 = vmatmul.mubr.bf16.gmra.mrb[0].mxu0 %v514
    %v550 = vpop.f32.mrb[0].mxu0
    %v551 = vadd.f32 0.0, %v550
    %v552 = vpop.f32.mrb[0].mxu0
    %v553 = vpop.f32.mrb[0].mxu0
    %v554 = vpop.f32.mrb[0].mxu0
    %555 = vdwg.mxu0
    %v556 = vrcp.pop %v507
    %v557 = vmul.f32 %v551, %v556
    %v558 = vpack.c.bf16 %v557, %v557
    %s559 = scalar_lea.vmem %s8, 4
    %v560 = vld [vmem:[%s559] sm:$0xf]
    %v562 = vsel %vm342, %v558, 0
    %vm564 = vcmask 1043456
    %v566 = vsel %vm564, %v560, 0
    %568 = vmatprep.subr.bf16.mxu0 0
    %569 = vmatpush1.bf16.msra.mxu0 %v566
    %570 = vmatprep.subr.bf16.mxu0 0
    %571 = vmatpush1.bf16.msra.mxu0 0
    %572 = vmatprep.subr.bf16.mxu0 0
    %573 = vmatpush1.bf16.msra.mxu0 0
    %574 = vmatprep.subr.bf16.mxu0 0
    %575 = vmatpush1.bf16.msra.mxu0 0
    %576 = vmatprep.subr.bf16.mxu0 0
    %577 = vmatpush1.bf16.msra.mxu0 0
    %578 = vmatprep.subr.bf16.mxu0 0
    %579 = vmatpush1.bf16.msra.mxu0 0
    %580 = vmatprep.subr.bf16.mxu0 0
    %581 = vmatpush1.bf16.msra.mxu0 0
    %582 = vmatprep.subr.bf16.mxu0 0
    %583 = vmatpush1.bf16.msra.mxu0 0
    %584 = vmatprep.subr.bf16.mxu0 0
    %585 = vmatpush1.bf16.msra.mxu0 0
    %586 = vmatprep.subr.bf16.mxu0 0
    %587 = vmatpush1.bf16.msra.mxu0 0
    %588 = vmatprep.subr.bf16.mxu0 0
    %589 = vmatpush1.bf16.msra.mxu0 0
    %590 = vmatprep.subr.bf16.mxu0 0
    %591 = vmatpush1.bf16.msra.mxu0 0
    %592 = vmatprep.subr.bf16.mxu0 0
    %593 = vmatpush1.bf16.msra.mxu0 0
    %594 = vmatprep.subr.bf16.mxu0 0
    %595 = vmatpush1.bf16.msra.mxu0 0
    %596 = vmatprep.subr.bf16.mxu0 0
    %597 = vmatpush1.bf16.msra.mxu0 0
    %598 = vmatprep.subr.bf16.mxu0 0
    %599 = vmatpush1.bf16.msra.mxu0 0
    %600 = vmatprep.mubr.bf16.mxu0 0
    %601 = vmatmul.mubr.bf16.gmra.mrb[0].mxu0 %v562
    %v602 = vpop.f32.mrb[0].mxu0
    %v603 = vadd.f32 0.0, %v602
    %v604 = vpop.f32.mrb[0].mxu0
    %v605 = vpop.f32.mrb[0].mxu0
    %v606 = vpop.f32.mrb[0].mxu0
    %607 = vdwg.mxu0
    %v609 = vsel %vm342, %v445, 0
    %v612 = vsel %vm564, %v446, 0
    %614 = vmatprep.subr.bf16.mxu0 0
    %615 = vmatpush1.bf16.msra.mxu0 %v612
    %616 = vmatprep.subr.bf16.mxu0 0
    %617 = vmatpush1.bf16.msra.mxu0 0
    %618 = vmatprep.subr.bf16.mxu0 0
    %619 = vmatpush1.bf16.msra.mxu0 0
    %620 = vmatprep.subr.bf16.mxu0 0
    %621 = vmatpush1.bf16.msra.mxu0 0
    %622 = vmatprep.subr.bf16.mxu0 0
    %623 = vmatpush1.bf16.msra.mxu0 0
    %624 = vmatprep.subr.bf16.mxu0 0
    %625 = vmatpush1.bf16.msra.mxu0 0
    %626 = vmatprep.subr.bf16.mxu0 0
    %627 = vmatpush1.bf16.msra.mxu0 0
    %628 = vmatprep.subr.bf16.mxu0 0
    %629 = vmatpush1.bf16.msra.mxu0 0
    %630 = vmatprep.subr.bf16.mxu0 0
    %631 = vmatpush1.bf16.msra.mxu0 0
    %632 = vmatprep.subr.bf16.mxu0 0
    %633 = vmatpush1.bf16.msra.mxu0 0
    %634 = vmatprep.subr.bf16.mxu0 0
    %635 = vmatpush1.bf16.msra.mxu0 0
    %636 = vmatprep.subr.bf16.mxu0 0
    %637 = vmatpush1.bf16.msra.mxu0 0
    %638 = vmatprep.subr.bf16.mxu0 0
    %639 = vmatpush1.bf16.msra.mxu0 0
    %640 = vmatprep.subr.bf16.mxu0 0
    %641 = vmatpush1.bf16.msra.mxu0 0
    %642 = vmatprep.subr.bf16.mxu0 0
    %643 = vmatpush1.bf16.msra.mxu0 0
    %644 = vmatprep.subr.bf16.mxu0 0
    %645 = vmatpush1.bf16.msra.mxu0 0
    %646 = vmatprep.mubr.bf16.mxu0 0
    %647 = vmatmul.mubr.bf16.gmra.mrb[0].mxu0 %v609
    %v648 = vpop.f32.mrb[0].mxu0
    %v649 = vadd.f32 %v603, %v648
    %v650 = vpop.f32.mrb[0].mxu0
    %v651 = vpop.f32.mrb[0].mxu0
    %v652 = vpop.f32.mrb[0].mxu0
    %653 = vdwg.mxu0
    %654 = vrot.lane.b32.xlu0 %v339, 112
    %v655 = vpop.permute.xlu0 %654
    %656 = vrot.lane.b32.xlu0 %v340, 112
    %v657 = vpop.permute.xlu0 %656
    %v659 = vsel %vm342, %v655, 0
    %v662 = vsel %vm342, %v657, 0
    %664 = vmatprep.subr.bf16.mxu0 0
    %665 = vmatpush1.bf16.xpose.msra.mxu0 %v662
    %666 = vmatprep.subr.bf16.mxu0 0
    %667 = vmatpush1.bf16.xpose.msra.mxu0 0
    %668 = vmatprep.subr.bf16.mxu0 0
    %669 = vmatpush1.bf16.xpose.msra.mxu0 0
    %670 = vmatprep.subr.bf16.mxu0 0
    %671 = vmatpush1.bf16.xpose.msra.mxu0 0
    %672 = vmatprep.subr.bf16.mxu0 0
    %673 = vmatpush1.bf16.xpose.msra.mxu0 0
    %674 = vmatprep.subr.bf16.mxu0 0
    %675 = vmatpush1.bf16.xpose.msra.mxu0 0
    %676 = vmatprep.subr.bf16.mxu0 0
    %677 = vmatpush1.bf16.xpose.msra.mxu0 0
    %678 = vmatprep.subr.bf16.mxu0 0
    %679 = vmatpush1.bf16.xpose.msra.mxu0 0
    %680 = vmatprep.subr.bf16.mxu0 0
    %681 = vmatpush1.bf16.xpose.msra.mxu0 0
    %682 = vmatprep.subr.bf16.mxu0 0
    %683 = vmatpush1.bf16.xpose.msra.mxu0 0
    %684 = vmatprep.subr.bf16.mxu0 0
    %685 = vmatpush1.bf16.xpose.msra.mxu0 0
    %686 = vmatprep.subr.bf16.mxu0 0
    %687 = vmatpush1.bf16.xpose.msra.mxu0 0
    %688 = vmatprep.subr.bf16.mxu0 0
    %689 = vmatpush1.bf16.xpose.msra.mxu0 0
    %690 = vmatprep.subr.bf16.mxu0 0
    %691 = vmatpush1.bf16.xpose.msra.mxu0 0
    %692 = vmatprep.subr.bf16.mxu0 0
    %693 = vmatpush1.bf16.xpose.msra.mxu0 0
    %694 = vmatprep.subr.bf16.mxu0 0
    %695 = vmatpush1.bf16.xpose.msra.mxu0 0
    %696 = vmatprep.mubr.bf16.mxu0 0
    %697 = vmatmul.mubr.bf16.gmra.mrb[0].mxu0 %v659
    %v698 = vpop.f32.mrb[0].mxu0
    %v699 = vadd.f32 0.0, %v698
    %v700 = vpop.f32.mrb[0].mxu0
    %v701 = vpop.f32.mrb[0].mxu0
    %v702 = vpop.f32.mrb[0].mxu0
    %703 = vdwg.mxu0
    %v704 = vsel %vm389, %v699, -inf
    %705 = vmax.xlane.f32.xlu0 %v704
    %v706 = vpop.xlane.xlu0 %705
    %v707 = vsub.f32 %v699, %v706
    %v708 = vmul.f32 %v707, 1.442695
    %v709 = vpow.pop %v708
    %v710 = vsel %vm389, %v709, 0.0
    %711 = vadd.xlane.f32.xlu0 %v710
    %v712 = vpop.xlane.xlu0 %711
    %v713 = vpack.c.bf16 %v709, %v709
    %714 = vrot.lane.b32.xlu0 %v341, 112
    %v715 = vpop.permute.xlu0 %714
    %v718 = vsel %vm389, %v713, 0
    %720 = vmatprep.subr.bf16.mxu0 0
    %721 = vmatpush1.bf16.msra.mxu0 %v715
    %722 = vmatprep.subr.bf16.mxu0 0
    %723 = vmatpush1.bf16.msra.mxu0 0
    %724 = vmatprep.subr.bf16.mxu0 0
    %725 = vmatpush1.bf16.msra.mxu0 0
    %726 = vmatprep.subr.bf16.mxu0 0
    %727 = vmatpush1.bf16.msra.mxu0 0
    %728 = vmatprep.subr.bf16.mxu0 0
    %729 = vmatpush1.bf16.msra.mxu0 0
    %730 = vmatprep.subr.bf16.mxu0 0
    %731 = vmatpush1.bf16.msra.mxu0 0
    %732 = vmatprep.subr.bf16.mxu0 0
    %733 = vmatpush1.bf16.msra.mxu0 0
    %734 = vmatprep.subr.bf16.mxu0 0
    %735 = vmatpush1.bf16.msra.mxu0 0
    %736 = vmatprep.subr.bf16.mxu0 0
    %737 = vmatpush1.bf16.msra.mxu0 0
    %738 = vmatprep.subr.bf16.mxu0 0
    %739 = vmatpush1.bf16.msra.mxu0 0
    %740 = vmatprep.subr.bf16.mxu0 0
    %741 = vmatpush1.bf16.msra.mxu0 0
    %742 = vmatprep.subr.bf16.mxu0 0
    %743 = vmatpush1.bf16.msra.mxu0 0
    %744 = vmatprep.subr.bf16.mxu0 0
    %745 = vmatpush1.bf16.msra.mxu0 0
    %746 = vmatprep.subr.bf16.mxu0 0
    %747 = vmatpush1.bf16.msra.mxu0 0
    %748 = vmatprep.subr.bf16.mxu0 0
    %749 = vmatpush1.bf16.msra.mxu0 0
    %750 = vmatprep.subr.bf16.mxu0 0
    %751 = vmatpush1.bf16.msra.mxu0 0
    %752 = vmatprep.mubr.bf16.mxu0 0
    %753 = vmatmul.mubr.bf16.gmra.mrb[0].mxu0 %v718
    %v754 = vpop.f32.mrb[0].mxu0
    %v755 = vadd.f32 0.0, %v754
    %v756 = vpop.f32.mrb[0].mxu0
    %v757 = vpop.f32.mrb[0].mxu0
    %v758 = vpop.f32.mrb[0].mxu0
    %759 = vdwg.mxu0
    %v760 = vrcp.pop %v712
    %v761 = vmul.f32 %v755, %v760
    %v762 = vpack.c.bf16 %v761, %v761
    %s763 = scalar_lea.vmem %s8, 8
    %v764 = vld [vmem:[%s763] sm:$0xf]
    %v766 = vsel %vm342, %v762, 0
    %v769 = vsel %vm564, %v764, 0
    %771 = vmatprep.subr.bf16.mxu0 0
    %772 = vmatpush1.bf16.msra.mxu0 %v769
    %773 = vmatprep.subr.bf16.mxu0 0
    %774 = vmatpush1.bf16.msra.mxu0 0
    %775 = vmatprep.subr.bf16.mxu0 0
    %776 = vmatpush1.bf16.msra.mxu0 0
    %777 = vmatprep.subr.bf16.mxu0 0
    %778 = vmatpush1.bf16.msra.mxu0 0
    %779 = vmatprep.subr.bf16.mxu0 0
    %780 = vmatpush1.bf16.msra.mxu0 0
    %781 = vmatprep.subr.bf16.mxu0 0
    %782 = vmatpush1.bf16.msra.mxu0 0
    %783 = vmatprep.subr.bf16.mxu0 0
    %784 = vmatpush1.bf16.msra.mxu0 0
    %785 = vmatprep.subr.bf16.mxu0 0
    %786 = vmatpush1.bf16.msra.mxu0 0
    %787 = vmatprep.subr.bf16.mxu0 0
    %788 = vmatpush1.bf16.msra.mxu0 0
    %789 = vmatprep.subr.bf16.mxu0 0
    %790 = vmatpush1.bf16.msra.mxu0 0
    %791 = vmatprep.subr.bf16.mxu0 0
    %792 = vmatpush1.bf16.msra.mxu0 0
    %793 = vmatprep.subr.bf16.mxu0 0
    %794 = vmatpush1.bf16.msra.mxu0 0
    %795 = vmatprep.subr.bf16.mxu0 0
    %796 = vmatpush1.bf16.msra.mxu0 0
    %797 = vmatprep.subr.bf16.mxu0 0
    %798 = vmatpush1.bf16.msra.mxu0 0
    %799 = vmatprep.subr.bf16.mxu0 0
    %800 = vmatpush1.bf16.msra.mxu0 0
    %801 = vmatprep.subr.bf16.mxu0 0
    %802 = vmatpush1.bf16.msra.mxu0 0
    %803 = vmatprep.mubr.bf16.mxu0 0
    %804 = vmatmul.mubr.bf16.gmra.mrb[0].mxu0 %v766
    %v805 = vpop.f32.mrb[0].mxu0
    %v806 = vadd.f32 0.0, %v805
    %v807 = vpop.f32.mrb[0].mxu0
    %v808 = vpop.f32.mrb[0].mxu0
    %v809 = vpop.f32.mrb[0].mxu0
    %810 = vdwg.mxu0
    %v811 = vadd.f32 %v649, %v806
    %812 = vrot.lane.b32.xlu0 %v339, 104
    %v813 = vpop.permute.xlu0 %812
    %814 = vrot.lane.b32.xlu0 %v340, 104
    %v815 = vpop.permute.xlu0 %814
    %v817 = vsel %vm342, %v813, 0
    %v820 = vsel %vm342, %v815, 0
    %822 = vmatprep.subr.bf16.mxu0 0
    %823 = vmatpush1.bf16.xpose.msra.mxu0 %v820
    %824 = vmatprep.subr.bf16.mxu0 0
    %825 = vmatpush1.bf16.xpose.msra.mxu0 0
    %826 = vmatprep.subr.bf16.mxu0 0
    %827 = vmatpush1.bf16.xpose.msra.mxu0 0
    %828 = vmatprep.subr.bf16.mxu0 0
    %829 = vmatpush1.bf16.xpose.msra.mxu0 0
    %830 = vmatprep.subr.bf16.mxu0 0
    %831 = vmatpush1.bf16.xpose.msra.mxu0 0
    %832 = vmatprep.subr.bf16.mxu0 0
    %833 = vmatpush1.bf16.xpose.msra.mxu0 0
    %834 = vmatprep.subr.bf16.mxu0 0
    %835 = vmatpush1.bf16.xpose.msra.mxu0 0
    %836 = vmatprep.subr.bf16.mxu0 0
    %837 = vmatpush1.bf16.xpose.msra.mxu0 0
    %838 = vmatprep.subr.bf16.mxu0 0
    %839 = vmatpush1.bf16.xpose.msra.mxu0 0
    %840 = vmatprep.subr.bf16.mxu0 0
    %841 = vmatpush1.bf16.xpose.msra.mxu0 0
    %842 = vmatprep.subr.bf16.mxu0 0
    %843 = vmatpush1.bf16.xpose.msra.mxu0 0
    %844 = vmatprep.subr.bf16.mxu0 0
    %845 = vmatpush1.bf16.xpose.msra.mxu0 0
    %846 = vmatprep.subr.bf16.mxu0 0
    %847 = vmatpush1.bf16.xpose.msra.mxu0 0
    %848 = vmatprep.subr.bf16.mxu0 0
    %849 = vmatpush1.bf16.xpose.msra.mxu0 0
    %850 = vmatprep.subr.bf16.mxu0 0
    %851 = vmatpush1.bf16.xpose.msra.mxu0 0
    %852 = vmatprep.subr.bf16.mxu0 0
    %853 = vmatpush1.bf16.xpose.msra.mxu0 0
    %854 = vmatprep.mubr.bf16.mxu0 0
    %855 = vmatmul.mubr.bf16.gmra.mrb[0].mxu0 %v817
    %v856 = vpop.f32.mrb[0].mxu0
    %v857 = vadd.f32 0.0, %v856
    %v858 = vpop.f32.mrb[0].mxu0
    %v859 = vpop.f32.mrb[0].mxu0
    %v860 = vpop.f32.mrb[0].mxu0
    %861 = vdwg.mxu0
    %v862 = vsel %vm389, %v857, -inf
    %863 = vmax.xlane.f32.xlu0 %v862
    %v864 = vpop.xlane.xlu0 %863
    %v865 = vsub.f32 %v857, %v864
    %v866 = vmul.f32 %v865, 1.442695
    %v867 = vpow.pop %v866
    %v868 = vsel %vm389, %v867, 0.0
    %869 = vadd.xlane.f32.xlu0 %v868
    %v870 = vpop.xlane.xlu0 %869
    %v871 = vpack.c.bf16 %v867, %v867
    %872 = vrot.lane.b32.xlu0 %v341, 104
    %v873 = vpop.permute.xlu0 %872
    %v876 = vsel %vm389, %v871, 0
    %878 = vmatprep.subr.bf16.mxu0 0
    %879 = vmatpush1.bf16.msra.mxu0 %v873
    %880 = vmatprep.subr.bf16.mxu0 0
    %881 = vmatpush1.bf16.msra.mxu0 0
    %882 = vmatprep.subr.bf16.mxu0 0
    %883 = vmatpush1.bf16.msra.mxu0 0
    %884 = vmatprep.subr.bf16.mxu0 0
    %885 = vmatpush1.bf16.msra.mxu0 0
    %886 = vmatprep.subr.bf16.mxu0 0
    %887 = vmatpush1.bf16.msra.mxu0 0
    %888 = vmatprep.subr.bf16.mxu0 0
    %889 = vmatpush1.bf16.msra.mxu0 0
    %890 = vmatprep.subr.bf16.mxu0 0
    %891 = vmatpush1.bf16.msra.mxu0 0
    %892 = vmatprep.subr.bf16.mxu0 0
    %893 = vmatpush1.bf16.msra.mxu0 0
    %894 = vmatprep.subr.bf16.mxu0 0
    %895 = vmatpush1.bf16.msra.mxu0 0
    %896 = vmatprep.subr.bf16.mxu0 0
    %897 = vmatpush1.bf16.msra.mxu0 0
    %898 = vmatprep.subr.bf16.mxu0 0
    %899 = vmatpush1.bf16.msra.mxu0 0
    %900 = vmatprep.subr.bf16.mxu0 0
    %901 = vmatpush1.bf16.msra.mxu0 0
    %902 = vmatprep.subr.bf16.mxu0 0
    %903 = vmatpush1.bf16.msra.mxu0 0
    %904 = vmatprep.subr.bf16.mxu0 0
    %905 = vmatpush1.bf16.msra.mxu0 0
    %906 = vmatprep.subr.bf16.mxu0 0
    %907 = vmatpush1.bf16.msra.mxu0 0
    %908 = vmatprep.subr.bf16.mxu0 0
    %909 = vmatpush1.bf16.msra.mxu0 0
    %910 = vmatprep.mubr.bf16.mxu0 0
    %911 = vmatmul.mubr.bf16.gmra.mrb[0].mxu0 %v876
    %v912 = vpop.f32.mrb[0].mxu0
    %v913 = vadd.f32 0.0, %v912
    %v914 = vpop.f32.mrb[0].mxu0
    %v915 = vpop.f32.mrb[0].mxu0
    %v916 = vpop.f32.mrb[0].mxu0
    %917 = vdwg.mxu0
    %v918 = vrcp.pop %v870
    %v919 = vmul.f32 %v913, %v918
    %v920 = vpack.c.bf16 %v919, %v919
    %s921 = scalar_lea.vmem %s8, 12
    %v922 = vld [vmem:[%s921] sm:$0xf]
    %v924 = vsel %vm342, %v920, 0
    %v927 = vsel %vm564, %v922, 0
    %929 = vmatprep.subr.bf16.mxu0 0
    %930 = vmatpush1.bf16.msra.mxu0 %v927
    %931 = vmatprep.subr.bf16.mxu0 0
    %932 = vmatpush1.bf16.msra.mxu0 0
    %933 = vmatprep.subr.bf16.mxu0 0
    %934 = vmatpush1.bf16.msra.mxu0 0
    %935 = vmatprep.subr.bf16.mxu0 0
    %936 = vmatpush1.bf16.msra.mxu0 0
    %937 = vmatprep.subr.bf16.mxu0 0
    %938 = vmatpush1.bf16.msra.mxu0 0
    %939 = vmatprep.subr.bf16.mxu0 0
    %940 = vmatpush1.bf16.msra.mxu0 0
    %941 = vmatprep.subr.bf16.mxu0 0
    %942 = vmatpush1.bf16.msra.mxu0 0
    %943 = vmatprep.subr.bf16.mxu0 0
    %944 = vmatpush1.bf16.msra.mxu0 0
    %945 = vmatprep.subr.bf16.mxu0 0
    %946 = vmatpush1.bf16.msra.mxu0 0
    %947 = vmatprep.subr.bf16.mxu0 0
    %948 = vmatpush1.bf16.msra.mxu0 0
    %949 = vmatprep.subr.bf16.mxu0 0
    %950 = vmatpush1.bf16.msra.mxu0 0
    %951 = vmatprep.subr.bf16.mxu0 0
    %952 = vmatpush1.bf16.msra.mxu0 0
    %953 = vmatprep.subr.bf16.mxu0 0
    %954 = vmatpush1.bf16.msra.mxu0 0
    %955 = vmatprep.subr.bf16.mxu0 0
    %956 = vmatpush1.bf16.msra.mxu0 0
    %957 = vmatprep.subr.bf16.mxu0 0
    %958 = vmatpush1.bf16.msra.mxu0 0
    %959 = vmatprep.subr.bf16.mxu0 0
    %960 = vmatpush1.bf16.msra.mxu0 0
    %961 = vmatprep.mubr.bf16.mxu0 0
    %962 = vmatmul.mubr.bf16.gmra.mrb[0].mxu0 %v924
    %v963 = vpop.f32.mrb[0].mxu0
    %v964 = vadd.f32 0.0, %v963
    %v965 = vpop.f32.mrb[0].mxu0
    %v966 = vpop.f32.mrb[0].mxu0
    %v967 = vpop.f32.mrb[0].mxu0
    %968 = vdwg.mxu0
    %v969 = vadd.f32 %v811, %v964
    %970 = vst.msk [vmem:[#allocation2] sm:$0xff] %vm132, %v969
    %v971 = vpack.c.bf16 %v178, %v178
    %v972 = vpack.c.bf16 %v264, %v261
    %v973 = vpack.c.bf16 %v336, %v333
    %v975 = vsel %vm342, %v971, 0
    %v978 = vsel %vm342, %v972, 0
    %980 = vmatprep.subr.bf16.mxu0 0
    %981 = vmatpush1.bf16.xpose.msra.mxu0 %v978
    %982 = vmatprep.subr.bf16.mxu0 0
    %983 = vmatpush1.bf16.xpose.msra.mxu0 0
    %984 = vmatprep.subr.bf16.mxu0 0
    %985 = vmatpush1.bf16.xpose.msra.mxu0 0
    %986 = vmatprep.subr.bf16.mxu0 0
    %987 = vmatpush1.bf16.xpose.msra.mxu0 0
    %988 = vmatprep.subr.bf16.mxu0 0
    %989 = vmatpush1.bf16.xpose.msra.mxu0 0
    %990 = vmatprep.subr.bf16.mxu0 0
    %991 = vmatpush1.bf16.xpose.msra.mxu0 0
    %992 = vmatprep.subr.bf16.mxu0 0
    %993 = vmatpush1.bf16.xpose.msra.mxu0 0
    %994 = vmatprep.subr.bf16.mxu0 0
    %995 = vmatpush1.bf16.xpose.msra.mxu0 0
    %996 = vmatprep.subr.bf16.mxu0 0
    %997 = vmatpush1.bf16.xpose.msra.mxu0 0
    %998 = vmatprep.subr.bf16.mxu0 0
    %999 = vmatpush1.bf16.xpose.msra.mxu0 0
    %1000 = vmatprep.subr.bf16.mxu0 0
    %1001 = vmatpush1.bf16.xpose.msra.mxu0 0
    %1002 = vmatprep.subr.bf16.mxu0 0
    %1003 = vmatpush1.bf16.xpose.msra.mxu0 0
    %1004 = vmatprep.subr.bf16.mxu0 0
    %1005 = vmatpush1.bf16.xpose.msra.mxu0 0
    %1006 = vmatprep.subr.bf16.mxu0 0
    %1007 = vmatpush1.bf16.xpose.msra.mxu0 0
    %1008 = vmatprep.subr.bf16.mxu0 0
    %1009 = vmatpush1.bf16.xpose.msra.mxu0 0
    %1010 = vmatprep.subr.bf16.mxu0 0
    %1011 = vmatpush1.bf16.xpose.msra.mxu0 0
    %1012 = vmatprep.mubr.bf16.mxu0 0
    %1013 = vmatmul.mubr.bf16.gmra.mrb[0].mxu0 %v975
    %v1014 = vpop.f32.mrb[0].mxu0
    %v1015 = vadd.f32 0.0, %v1014
    %v1016 = vpop.f32.mrb[0].mxu0
    %v1017 = vpop.f32.mrb[0].mxu0
    %v1018 = vpop.f32.mrb[0].mxu0
    %1019 = vdwg.mxu0
    %v1020 = vsel %vm389, %v1015, -inf
    %1021 = vmax.xlane.f32.xlu0 %v1020
    %v1022 = vpop.xlane.xlu0 %1021
    %v1023 = vsub.f32 %v1015, %v1022
    %v1024 = vmul.f32 %v1023, 1.442695
    %v1025 = vpow.pop %v1024
    %v1026 = vsel %vm389, %v1025, 0.0
    %1027 = vadd.xlane.f32.xlu0 %v1026
    %v1028 = vpop.xlane.xlu0 %1027
    %v1029 = vpack.c.bf16 %v1025, %v1025
    %v1031 = vsel %vm389, %v1029, 0
    %1033 = vmatprep.subr.bf16.mxu0 0
    %1034 = vmatpush1.bf16.msra.mxu0 %v973
    %1035 = vmatprep.subr.bf16.mxu0 0
    %1036 = vmatpush1.bf16.msra.mxu0 0
    %1037 = vmatprep.subr.bf16.mxu0 0
    %1038 = vmatpush1.bf16.msra.mxu0 0
    %1039 = vmatprep.subr.bf16.mxu0 0
    %1040 = vmatpush1.bf16.msra.mxu0 0
    %1041 = vmatprep.subr.bf16.mxu0 0
    %1042 = vmatpush1.bf16.msra.mxu0 0
    %1043 = vmatprep.subr.bf16.mxu0 0
    %1044 = vmatpush1.bf16.msra.mxu0 0
    %1045 = vmatprep.subr.bf16.mxu0 0
    %1046 = vmatpush1.bf16.msra.mxu0 0
    %1047 = vmatprep.subr.bf16.mxu0 0
    %1048 = vmatpush1.bf16.msra.mxu0 0
    %1049 = vmatprep.subr.bf16.mxu0 0
    %1050 = vmatpush1.bf16.msra.mxu0 0
    %1051 = vmatprep.subr.bf16.mxu0 0
    %1052 = vmatpush1.bf16.msra.mxu0 0
    %1053 = vmatprep.subr.bf16.mxu0 0
    %1054 = vmatpush1.bf16.msra.mxu0 0
    %1055 = vmatprep.subr.bf16.mxu0 0
    %1056 = vmatpush1.bf16.msra.mxu0 0
    %1057 = vmatprep.subr.bf16.mxu0 0
    %1058 = vmatpush1.bf16.msra.mxu0 0
    %1059 = vmatprep.subr.bf16.mxu0 0
    %1060 = vmatpush1.bf16.msra.mxu0 0
    %1061 = vmatprep.subr.bf16.mxu0 0
    %1062 = vmatpush1.bf16.msra.mxu0 0
    %1063 = vmatprep.subr.bf16.mxu0 0
    %1064 = vmatpush1.bf16.msra.mxu0 0
    %1065 = vmatprep.mubr.bf16.mxu0 0
    %1066 = vmatmul.mubr.bf16.gmra.mrb[0].mxu0 %v1031
    %v1067 = vpop.f32.mrb[0].mxu0
    %v1068 = vadd.f32 0.0, %v1067
    %v1069 = vpop.f32.mrb[0].mxu0
    %v1070 = vpop.f32.mrb[0].mxu0
    %v1071 = vpop.f32.mrb[0].mxu0
    %1072 = vdwg.mxu0
    %v1073 = vrcp.pop %v1028
    %v1074 = vmul.f32 %v1068, %v1073
    %v1075 = vpack.c.bf16 %v1074, %v1074
    %v1076 = vld [vmem:[%s8] sm:$0xf]
    %1078 = vrot.lane.b32.xlu0 %v971, 120
    %v1079 = vpop.permute.xlu0 %1078
    %1081 = vrot.lane.b32.xlu0 %v972, 120
    %v1082 = vpop.permute.xlu0 %1081
    %v1084 = vsel %vm342, %v1079, 0
    %v1087 = vsel %vm342, %v1082, 0
    %1089 = vmatprep.subr.bf16.mxu0 0
    %1090 = vmatpush1.bf16.xpose.msra.mxu0 %v1087
    %1091 = vmatprep.subr.bf16.mxu0 0
    %1092 = vmatpush1.bf16.xpose.msra.mxu0 0
    %1093 = vmatprep.subr.bf16.mxu0 0
    %1094 = vmatpush1.bf16.xpose.msra.mxu0 0
    %1095 = vmatprep.subr.bf16.mxu0 0
    %1096 = vmatpush1.bf16.xpose.msra.mxu0 0
    %1097 = vmatprep.subr.bf16.mxu0 0
    %1098 = vmatpush1.bf16.xpose.msra.mxu0 0
    %1099 = vmatprep.subr.bf16.mxu0 0
    %1100 = vmatpush1.bf16.xpose.msra.mxu0 0
    %1101 = vmatprep.subr.bf16.mxu0 0
    %1102 = vmatpush1.bf16.xpose.msra.mxu0 0
    %1103 = vmatprep.subr.bf16.mxu0 0
    %1104 = vmatpush1.bf16.xpose.msra.mxu0 0
    %1105 = vmatprep.subr.bf16.mxu0 0
    %1106 = vmatpush1.bf16.xpose.msra.mxu0 0
    %1107 = vmatprep.subr.bf16.mxu0 0
    %1108 = vmatpush1.bf16.xpose.msra.mxu0 0
    %1109 = vmatprep.subr.bf16.mxu0 0
    %1110 = vmatpush1.bf16.xpose.msra.mxu0 0
    %1111 = vmatprep.subr.bf16.mxu0 0
    %1112 = vmatpush1.bf16.xpose.msra.mxu0 0
    %1113 = vmatprep.subr.bf16.mxu0 0
    %1114 = vmatpush1.bf16.xpose.msra.mxu0 0
    %1115 = vmatprep.subr.bf16.mxu0 0
    %1116 = vmatpush1.bf16.xpose.msra.mxu0 0
    %1117 = vmatprep.subr.bf16.mxu0 0
    %1118 = vmatpush1.bf16.xpose.msra.mxu0 0
    %1119 = vmatprep.subr.bf16.mxu0 0
    %1120 = vmatpush1.bf16.xpose.msra.mxu0 0
    %1121 = vmatprep.mubr.bf16.mxu0 0
    %1122 = vmatmul.mubr.bf16.gmra.mrb[0].mxu0 %v1084
    %v1123 = vpop.f32.mrb[0].mxu0
    %v1124 = vadd.f32 0.0, %v1123
    %v1125 = vpop.f32.mrb[0].mxu0
    %v1126 = vpop.f32.mrb[0].mxu0
    %v1127 = vpop.f32.mrb[0].mxu0
    %1128 = vdwg.mxu0
    %v1129 = vsel %vm389, %v1124, -inf
    %1130 = vmax.xlane.f32.xlu0 %v1129
    %v1131 = vpop.xlane.xlu0 %1130
    %v1132 = vsub.f32 %v1124, %v1131
    %v1133 = vmul.f32 %v1132, 1.442695
    %v1134 = vpow.pop %v1133
    %v1135 = vsel %vm389, %v1134, 0.0
    %1136 = vadd.xlane.f32.xlu0 %v1135
    %v1137 = vpop.xlane.xlu0 %1136
    %v1138 = vpack.c.bf16 %v1134, %v1134
    %1140 = vrot.lane.b32.xlu0 %v973, 120
    %v1141 = vpop.permute.xlu0 %1140
    %v1144 = vsel %vm389, %v1138, 0
    %1146 = vmatprep.subr.bf16.mxu0 0
    %1147 = vmatpush1.bf16.msra.mxu0 %v1141
    %1148 = vmatprep.subr.bf16.mxu0 0
    %1149 = vmatpush1.bf16.msra.mxu0 0
    %1150 = vmatprep.subr.bf16.mxu0 0
    %1151 = vmatpush1.bf16.msra.mxu0 0
    %1152 = vmatprep.subr.bf16.mxu0 0
    %1153 = vmatpush1.bf16.msra.mxu0 0
    %1154 = vmatprep.subr.bf16.mxu0 0
    %1155 = vmatpush1.bf16.msra.mxu0 0
    %1156 = vmatprep.subr.bf16.mxu0 0
    %1157 = vmatpush1.bf16.msra.mxu0 0
    %1158 = vmatprep.subr.bf16.mxu0 0
    %1159 = vmatpush1.bf16.msra.mxu0 0
    %1160 = vmatprep.subr.bf16.mxu0 0
    %1161 = vmatpush1.bf16.msra.mxu0 0
    %1162 = vmatprep.subr.bf16.mxu0 0
    %1163 = vmatpush1.bf16.msra.mxu0 0
    %1164 = vmatprep.subr.bf16.mxu0 0
    %1165 = vmatpush1.bf16.msra.mxu0 0
    %1166 = vmatprep.subr.bf16.mxu0 0
    %1167 = vmatpush1.bf16.msra.mxu0 0
    %1168 = vmatprep.subr.bf16.mxu0 0
    %1169 = vmatpush1.bf16.msra.mxu0 0
    %1170 = vmatprep.subr.bf16.mxu0 0
    %1171 = vmatpush1.bf16.msra.mxu0 0
    %1172 = vmatprep.subr.bf16.mxu0 0
    %1173 = vmatpush1.bf16.msra.mxu0 0
    %1174 = vmatprep.subr.bf16.mxu0 0
    %1175 = vmatpush1.bf16.msra.mxu0 0
    %1176 = vmatprep.subr.bf16.mxu0 0
    %1177 = vmatpush1.bf16.msra.mxu0 0
    %1178 = vmatprep.mubr.bf16.mxu0 0
    %1179 = vmatmul.mubr.bf16.gmra.mrb[0].mxu0 %v1144
    %v1180 = vpop.f32.mrb[0].mxu0
    %v1181 = vadd.f32 0.0, %v1180
    %v1182 = vpop.f32.mrb[0].mxu0
    %v1183 = vpop.f32.mrb[0].mxu0
    %v1184 = vpop.f32.mrb[0].mxu0
    %1185 = vdwg.mxu0
    %v1186 = vrcp.pop %v1137
    %v1187 = vmul.f32 %v1181, %v1186
    %v1188 = vpack.c.bf16 %v1187, %v1187
    %v1189 = vld [vmem:[%s559] sm:$0xf]
    %v1191 = vsel %vm342, %v1188, 0
    %v1194 = vsel %vm564, %v1189, 0
    %1196 = vmatprep.subr.bf16.mxu0 0
    %1197 = vmatpush1.bf16.msra.mxu0 %v1194
    %1198 = vmatprep.subr.bf16.mxu0 0
    %1199 = vmatpush1.bf16.msra.mxu0 0
    %1200 = vmatprep.subr.bf16.mxu0 0
    %1201 = vmatpush1.bf16.msra.mxu0 0
    %1202 = vmatprep.subr.bf16.mxu0 0
    %1203 = vmatpush1.bf16.msra.mxu0 0
    %1204 = vmatprep.subr.bf16.mxu0 0
    %1205 = vmatpush1.bf16.msra.mxu0 0
    %1206 = vmatprep.subr.bf16.mxu0 0
    %1207 = vmatpush1.bf16.msra.mxu0 0
    %1208 = vmatprep.subr.bf16.mxu0 0
    %1209 = vmatpush1.bf16.msra.mxu0 0
    %1210 = vmatprep.subr.bf16.mxu0 0
    %1211 = vmatpush1.bf16.msra.mxu0 0
    %1212 = vmatprep.subr.bf16.mxu0 0
    %1213 = vmatpush1.bf16.msra.mxu0 0
    %1214 = vmatprep.subr.bf16.mxu0 0
    %1215 = vmatpush1.bf16.msra.mxu0 0
    %1216 = vmatprep.subr.bf16.mxu0 0
    %1217 = vmatpush1.bf16.msra.mxu0 0
    %1218 = vmatprep.subr.bf16.mxu0 0
    %1219 = vmatpush1.bf16.msra.mxu0 0
    %1220 = vmatprep.subr.bf16.mxu0 0
    %1221 = vmatpush1.bf16.msra.mxu0 0
    %1222 = vmatprep.subr.bf16.mxu0 0
    %1223 = vmatpush1.bf16.msra.mxu0 0
    %1224 = vmatprep.subr.bf16.mxu0 0
    %1225 = vmatpush1.bf16.msra.mxu0 0
    %1226 = vmatprep.subr.bf16.mxu0 0
    %1227 = vmatpush1.bf16.msra.mxu0 0
    %1228 = vmatprep.mubr.bf16.mxu0 0
    %1229 = vmatmul.mubr.bf16.gmra.mrb[0].mxu0 %v1191
    %v1230 = vpop.f32.mrb[0].mxu0
    %v1231 = vadd.f32 0.0, %v1230
    %v1232 = vpop.f32.mrb[0].mxu0
    %v1233 = vpop.f32.mrb[0].mxu0
    %v1234 = vpop.f32.mrb[0].mxu0
    %1235 = vdwg.mxu0
    %v1237 = vsel %vm342, %v1075, 0
    %v1240 = vsel %vm564, %v1076, 0
    %1242 = vmatprep.subr.bf16.mxu0 0
    %1243 = vmatpush1.bf16.msra.mxu0 %v1240
    %1244 = vmatprep.subr.bf16.mxu0 0
    %1245 = vmatpush1.bf16.msra.mxu0 0
    %1246 = vmatprep.subr.bf16.mxu0 0
    %1247 = vmatpush1.bf16.msra.mxu0 0
    %1248 = vmatprep.subr.bf16.mxu0 0
    %1249 = vmatpush1.bf16.msra.mxu0 0
    %1250 = vmatprep.subr.bf16.mxu0 0
    %1251 = vmatpush1.bf16.msra.mxu0 0
    %1252 = vmatprep.subr.bf16.mxu0 0
    %1253 = vmatpush1.bf16.msra.mxu0 0
    %1254 = vmatprep.subr.bf16.mxu0 0
    %1255 = vmatpush1.bf16.msra.mxu0 0
    %1256 = vmatprep.subr.bf16.mxu0 0
    %1257 = vmatpush1.bf16.msra.mxu0 0
    %1258 = vmatprep.subr.bf16.mxu0 0
    %1259 = vmatpush1.bf16.msra.mxu0 0
    %1260 = vmatprep.subr.bf16.mxu0 0
    %1261 = vmatpush1.bf16.msra.mxu0 0
    %1262 = vmatprep.subr.bf16.mxu0 0
    %1263 = vmatpush1.bf16.msra.mxu0 0
    %1264 = vmatprep.subr.bf16.mxu0 0
    %1265 = vmatpush1.bf16.msra.mxu0 0
    %1266 = vmatprep.subr.bf16.mxu0 0
    %1267 = vmatpush1.bf16.msra.mxu0 0
    %1268 = vmatprep.subr.bf16.mxu0 0
    %1269 = vmatpush1.bf16.msra.mxu0 0
    %1270 = vmatprep.subr.bf16.mxu0 0
    %1271 = vmatpush1.bf16.msra.mxu0 0
    %1272 = vmatprep.subr.bf16.mxu0 0
    %1273 = vmatpush1.bf16.msra.mxu0 0
    %1274 = vmatprep.mubr.bf16.mxu0 0
    %1275 = vmatmul.mubr.bf16.gmra.mrb[0].mxu0 %v1237
    %v1276 = vpop.f32.mrb[0].mxu0
    %v1277 = vadd.f32 %v1231, %v1276
    %v1278 = vpop.f32.mrb[0].mxu0
    %v1279 = vpop.f32.mrb[0].mxu0
    %v1280 = vpop.f32.mrb[0].mxu0
    %1281 = vdwg.mxu0
    %1282 = vrot.lane.b32.xlu0 %v971, 112
    %v1283 = vpop.permute.xlu0 %1282
    %1284 = vrot.lane.b32.xlu0 %v972, 112
    %v1285 = vpop.permute.xlu0 %1284
    %v1287 = vsel %vm342, %v1283, 0
    %v1290 = vsel %vm342, %v1285, 0
    %1292 = vmatprep.subr.bf16.mxu0 0
    %1293 = vmatpush1.bf16.xpose.msra.mxu0 %v1290
    %1294 = vmatprep.subr.bf16.mxu0 0
    %1295 = vmatpush1.bf16.xpose.msra.mxu0 0
    %1296 = vmatprep.subr.bf16.mxu0 0
    %1297 = vmatpush1.bf16.xpose.msra.mxu0 0
    %1298 = vmatprep.subr.bf16.mxu0 0
    %1299 = vmatpush1.bf16.xpose.msra.mxu0 0
    %1300 = vmatprep.subr.bf16.mxu0 0
    %1301 = vmatpush1.bf16.xpose.msra.mxu0 0
    %1302 = vmatprep.subr.bf16.mxu0 0
    %1303 = vmatpush1.bf16.xpose.msra.mxu0 0
    %1304 = vmatprep.subr.bf16.mxu0 0
    %1305 = vmatpush1.bf16.xpose.msra.mxu0 0
    %1306 = vmatprep.subr.bf16.mxu0 0
    %1307 = vmatpush1.bf16.xpose.msra.mxu0 0
    %1308 = vmatprep.subr.bf16.mxu0 0
    %1309 = vmatpush1.bf16.xpose.msra.mxu0 0
    %1310 = vmatprep.subr.bf16.mxu0 0
    %1311 = vmatpush1.bf16.xpose.msra.mxu0 0
    %1312 = vmatprep.subr.bf16.mxu0 0
    %1313 = vmatpush1.bf16.xpose.msra.mxu0 0
    %1314 = vmatprep.subr.bf16.mxu0 0
    %1315 = vmatpush1.bf16.xpose.msra.mxu0 0
    %1316 = vmatprep.subr.bf16.mxu0 0
    %1317 = vmatpush1.bf16.xpose.msra.mxu0 0
    %1318 = vmatprep.subr.bf16.mxu0 0
    %1319 = vmatpush1.bf16.xpose.msra.mxu0 0
    %1320 = vmatprep.subr.bf16.mxu0 0
    %1321 = vmatpush1.bf16.xpose.msra.mxu0 0
    %1322 = vmatprep.subr.bf16.mxu0 0
    %1323 = vmatpush1.bf16.xpose.msra.mxu0 0
    %1324 = vmatprep.mubr.bf16.mxu0 0
    %1325 = vmatmul.mubr.bf16.gmra.mrb[0].mxu0 %v1287
    %v1326 = vpop.f32.mrb[0].mxu0
    %v1327 = vadd.f32 0.0, %v1326
    %v1328 = vpop.f32.mrb[0].mxu0
    %v1329 = vpop.f32.mrb[0].mxu0
    %v1330 = vpop.f32.mrb[0].mxu0
    %1331 = vdwg.mxu0
    %v1332 = vsel %vm389, %v1327, -inf
    %1333 = vmax.xlane.f32.xlu0 %v1332
    %v1334 = vpop.xlane.xlu0 %1333
    %v1335 = vsub.f32 %v1327, %v1334
    %v1336 = vmul.f32 %v1335, 1.442695
    %v1337 = vpow.pop %v1336
    %v1338 = vsel %vm389, %v1337, 0.0
    %1339 = vadd.xlane.f32.xlu0 %v1338
    %v1340 = vpop.xlane.xlu0 %1339
    %v1341 = vpack.c.bf16 %v1337, %v1337
    %1342 = vrot.lane.b32.xlu0 %v973, 112
    %v1343 = vpop.permute.xlu0 %1342
    %v1346 = vsel %vm389, %v1341, 0
    %1348 = vmatprep.subr.bf16.mxu0 0
    %1349 = vmatpush1.bf16.msra.mxu0 %v1343
    %1350 = vmatprep.subr.bf16.mxu0 0
    %1351 = vmatpush1.bf16.msra.mxu0 0
    %1352 = vmatprep.subr.bf16.mxu0 0
    %1353 = vmatpush1.bf16.msra.mxu0 0
    %1354 = vmatprep.subr.bf16.mxu0 0
    %1355 = vmatpush1.bf16.msra.mxu0 0
    %1356 = vmatprep.subr.bf16.mxu0 0
    %1357 = vmatpush1.bf16.msra.mxu0 0
    %1358 = vmatprep.subr.bf16.mxu0 0
    %1359 = vmatpush1.bf16.msra.mxu0 0
    %1360 = vmatprep.subr.bf16.mxu0 0
    %1361 = vmatpush1.bf16.msra.mxu0 0
    %1362 = vmatprep.subr.bf16.mxu0 0
    %1363 = vmatpush1.bf16.msra.mxu0 0
    %1364 = vmatprep.subr.bf16.mxu0 0
    %1365 = vmatpush1.bf16.msra.mxu0 0
    %1366 = vmatprep.subr.bf16.mxu0 0
    %1367 = vmatpush1.bf16.msra.mxu0 0
    %1368 = vmatprep.subr.bf16.mxu0 0
    %1369 = vmatpush1.bf16.msra.mxu0 0
    %1370 = vmatprep.subr.bf16.mxu0 0
    %1371 = vmatpush1.bf16.msra.mxu0 0
    %1372 = vmatprep.subr.bf16.mxu0 0
    %1373 = vmatpush1.bf16.msra.mxu0 0
    %1374 = vmatprep.subr.bf16.mxu0 0
    %1375 = vmatpush1.bf16.msra.mxu0 0
    %1376 = vmatprep.subr.bf16.mxu0 0
    %1377 = vmatpush1.bf16.msra.mxu0 0
    %1378 = vmatprep.subr.bf16.mxu0 0
    %1379 = vmatpush1.bf16.msra.mxu0 0
    %1380 = vmatprep.mubr.bf16.mxu0 0
    %1381 = vmatmul.mubr.bf16.gmra.mrb[0].mxu0 %v1346
    %v1382 = vpop.f32.mrb[0].mxu0
    %v1383 = vadd.f32 0.0, %v1382
    %v1384 = vpop.f32.mrb[0].mxu0
    %v1385 = vpop.f32.mrb[0].mxu0
    %v1386 = vpop.f32.mrb[0].mxu0
    %1387 = vdwg.mxu0
    %v1388 = vrcp.pop %v1340
    %v1389 = vmul.f32 %v1383, %v1388
    %v1390 = vpack.c.bf16 %v1389, %v1389
    %v1391 = vld [vmem:[%s763] sm:$0xf]
    %v1393 = vsel %vm342, %v1390, 0
    %v1396 = vsel %vm564, %v1391, 0
    %1398 = vmatprep.subr.bf16.mxu0 0
    %1399 = vmatpush1.bf16.msra.mxu0 %v1396
    %1400 = vmatprep.subr.bf16.mxu0 0
    %1401 = vmatpush1.bf16.msra.mxu0 0
    %1402 = vmatprep.subr.bf16.mxu0 0
    %1403 = vmatpush1.bf16.msra.mxu0 0
    %1404 = vmatprep.subr.bf16.mxu0 0
    %1405 = vmatpush1.bf16.msra.mxu0 0
    %1406 = vmatprep.subr.bf16.mxu0 0
    %1407 = vmatpush1.bf16.msra.mxu0 0
    %1408 = vmatprep.subr.bf16.mxu0 0
    %1409 = vmatpush1.bf16.msra.mxu0 0
    %1410 = vmatprep.subr.bf16.mxu0 0
    %1411 = vmatpush1.bf16.msra.mxu0 0
    %1412 = vmatprep.subr.bf16.mxu0 0
    %1413 = vmatpush1.bf16.msra.mxu0 0
    %1414 = vmatprep.subr.bf16.mxu0 0
    %1415 = vmatpush1.bf16.msra.mxu0 0
    %1416 = vmatprep.subr.bf16.mxu0 0
    %1417 = vmatpush1.bf16.msra.mxu0 0
    %1418 = vmatprep.subr.bf16.mxu0 0
    %1419 = vmatpush1.bf16.msra.mxu0 0
    %1420 = vmatprep.subr.bf16.mxu0 0
    %1421 = vmatpush1.bf16.msra.mxu0 0
    %1422 = vmatprep.subr.bf16.mxu0 0
    %1423 = vmatpush1.bf16.msra.mxu0 0
    %1424 = vmatprep.subr.bf16.mxu0 0
    %1425 = vmatpush1.bf16.msra.mxu0 0
    %1426 = vmatprep.subr.bf16.mxu0 0
    %1427 = vmatpush1.bf16.msra.mxu0 0
    %1428 = vmatprep.subr.bf16.mxu0 0
    %1429 = vmatpush1.bf16.msra.mxu0 0
    %1430 = vmatprep.mubr.bf16.mxu0 0
    %1431 = vmatmul.mubr.bf16.gmra.mrb[0].mxu0 %v1393
    %v1432 = vpop.f32.mrb[0].mxu0
    %v1433 = vadd.f32 0.0, %v1432
    %v1434 = vpop.f32.mrb[0].mxu0
    %v1435 = vpop.f32.mrb[0].mxu0
    %v1436 = vpop.f32.mrb[0].mxu0
    %1437 = vdwg.mxu0
    %v1438 = vadd.f32 %v1277, %v1433
    %1439 = vrot.lane.b32.xlu0 %v971, 104
    %v1440 = vpop.permute.xlu0 %1439
    %1441 = vrot.lane.b32.xlu0 %v972, 104
    %v1442 = vpop.permute.xlu0 %1441
    %v1444 = vsel %vm342, %v1440, 0
    %v1447 = vsel %vm342, %v1442, 0
    %1449 = vmatprep.subr.bf16.mxu0 0
    %1450 = vmatpush1.bf16.xpose.msra.mxu0 %v1447
    %1451 = vmatprep.subr.bf16.mxu0 0
    %1452 = vmatpush1.bf16.xpose.msra.mxu0 0
    %1453 = vmatprep.subr.bf16.mxu0 0
    %1454 = vmatpush1.bf16.xpose.msra.mxu0 0
    %1455 = vmatprep.subr.bf16.mxu0 0
    %1456 = vmatpush1.bf16.xpose.msra.mxu0 0
    %1457 = vmatprep.subr.bf16.mxu0 0
    %1458 = vmatpush1.bf16.xpose.msra.mxu0 0
    %1459 = vmatprep.subr.bf16.mxu0 0
    %1460 = vmatpush1.bf16.xpose.msra.mxu0 0
    %1461 = vmatprep.subr.bf16.mxu0 0
    %1462 = vmatpush1.bf16.xpose.msra.mxu0 0
    %1463 = vmatprep.subr.bf16.mxu0 0
    %1464 = vmatpush1.bf16.xpose.msra.mxu0 0
    %1465 = vmatprep.subr.bf16.mxu0 0
    %1466 = vmatpush1.bf16.xpose.msra.mxu0 0
    %1467 = vmatprep.subr.bf16.mxu0 0
    %1468 = vmatpush1.bf16.xpose.msra.mxu0 0
    %1469 = vmatprep.subr.bf16.mxu0 0
    %1470 = vmatpush1.bf16.xpose.msra.mxu0 0
    %1471 = vmatprep.subr.bf16.mxu0 0
    %1472 = vmatpush1.bf16.xpose.msra.mxu0 0
    %1473 = vmatprep.subr.bf16.mxu0 0
    %1474 = vmatpush1.bf16.xpose.msra.mxu0 0
    %1475 = vmatprep.subr.bf16.mxu0 0
    %1476 = vmatpush1.bf16.xpose.msra.mxu0 0
    %1477 = vmatprep.subr.bf16.mxu0 0
    %1478 = vmatpush1.bf16.xpose.msra.mxu0 0
    %1479 = vmatprep.subr.bf16.mxu0 0
    %1480 = vmatpush1.bf16.xpose.msra.mxu0 0
    %1481 = vmatprep.mubr.bf16.mxu0 0
    %1482 = vmatmul.mubr.bf16.gmra.mrb[0].mxu0 %v1444
    %v1483 = vpop.f32.mrb[0].mxu0
    %v1484 = vadd.f32 0.0, %v1483
    %v1485 = vpop.f32.mrb[0].mxu0
    %v1486 = vpop.f32.mrb[0].mxu0
    %v1487 = vpop.f32.mrb[0].mxu0
    %1488 = vdwg.mxu0
    %v1489 = vsel %vm389, %v1484, -inf
    %1490 = vmax.xlane.f32.xlu0 %v1489
    %v1491 = vpop.xlane.xlu0 %1490
    %v1492 = vsub.f32 %v1484, %v1491
    %v1493 = vmul.f32 %v1492, 1.442695
    %v1494 = vpow.pop %v1493
    %v1495 = vsel %vm389, %v1494, 0.0
    %1496 = vadd.xlane.f32.xlu0 %v1495
    %v1497 = vpop.xlane.xlu0 %1496
    %v1498 = vpack.c.bf16 %v1494, %v1494
    %1499 = vrot.lane.b32.xlu0 %v973, 104
    %v1500 = vpop.permute.xlu0 %1499
    %v1503 = vsel %vm389, %v1498, 0
    %1505 = vmatprep.subr.bf16.mxu0 0
    %1506 = vmatpush1.bf16.msra.mxu0 %v1500
    %1507 = vmatprep.subr.bf16.mxu0 0
    %1508 = vmatpush1.bf16.msra.mxu0 0
    %1509 = vmatprep.subr.bf16.mxu0 0
    %1510 = vmatpush1.bf16.msra.mxu0 0
    %1511 = vmatprep.subr.bf16.mxu0 0
    %1512 = vmatpush1.bf16.msra.mxu0 0
    %1513 = vmatprep.subr.bf16.mxu0 0
    %1514 = vmatpush1.bf16.msra.mxu0 0
    %1515 = vmatprep.subr.bf16.mxu0 0
    %1516 = vmatpush1.bf16.msra.mxu0 0
    %1517 = vmatprep.subr.bf16.mxu0 0
    %1518 = vmatpush1.bf16.msra.mxu0 0
    %1519 = vmatprep.subr.bf16.mxu0 0
    %1520 = vmatpush1.bf16.msra.mxu0 0
    %1521 = vmatprep.subr.bf16.mxu0 0
    %1522 = vmatpush1.bf16.msra.mxu0 0
    %1523 = vmatprep.subr.bf16.mxu0 0
    %1524 = vmatpush1.bf16.msra.mxu0 0
    %1525 = vmatprep.subr.bf16.mxu0 0
    %1526 = vmatpush1.bf16.msra.mxu0 0
    %1527 = vmatprep.subr.bf16.mxu0 0
    %1528 = vmatpush1.bf16.msra.mxu0 0
    %1529 = vmatprep.subr.bf16.mxu0 0
    %1530 = vmatpush1.bf16.msra.mxu0 0
    %1531 = vmatprep.subr.bf16.mxu0 0
    %1532 = vmatpush1.bf16.msra.mxu0 0
    %1533 = vmatprep.subr.bf16.mxu0 0
    %1534 = vmatpush1.bf16.msra.mxu0 0
    %1535 = vmatprep.subr.bf16.mxu0 0
    %1536 = vmatpush1.bf16.msra.mxu0 0
    %1537 = vmatprep.mubr.bf16.mxu0 0
    %1538 = vmatmul.mubr.bf16.gmra.mrb[0].mxu0 %v1503
    %v1539 = vpop.f32.mrb[0].mxu0
    %v1540 = vadd.f32 0.0, %v1539
    %v1541 = vpop.f32.mrb[0].mxu0
    %v1542 = vpop.f32.mrb[0].mxu0
    %v1543 = vpop.f32.mrb[0].mxu0
    %1544 = vdwg.mxu0
    %v1545 = vrcp.pop %v1497
    %v1546 = vmul.f32 %v1540, %v1545
    %v1547 = vpack.c.bf16 %v1546, %v1546
    %v1548 = vld [vmem:[%s921] sm:$0xf]
    %v1550 = vsel %vm342, %v1547, 0
    %v1553 = vsel %vm564, %v1548, 0
    %1555 = vmatprep.subr.bf16.mxu0 0
    %1556 = vmatpush1.bf16.msra.mxu0 %v1553
    %1557 = vmatprep.subr.bf16.mxu0 0
    %1558 = vmatpush1.bf16.msra.mxu0 0
    %1559 = vmatprep.subr.bf16.mxu0 0
    %1560 = vmatpush1.bf16.msra.mxu0 0
    %1561 = vmatprep.subr.bf16.mxu0 0
    %1562 = vmatpush1.bf16.msra.mxu0 0
    %1563 = vmatprep.subr.bf16.mxu0 0
    %1564 = vmatpush1.bf16.msra.mxu0 0
    %1565 = vmatprep.subr.bf16.mxu0 0
    %1566 = vmatpush1.bf16.msra.mxu0 0
    %1567 = vmatprep.subr.bf16.mxu0 0
    %1568 = vmatpush1.bf16.msra.mxu0 0
    %1569 = vmatprep.subr.bf16.mxu0 0
    %1570 = vmatpush1.bf16.msra.mxu0 0
    %1571 = vmatprep.subr.bf16.mxu0 0
    %1572 = vmatpush1.bf16.msra.mxu0 0
    %1573 = vmatprep.subr.bf16.mxu0 0
    %1574 = vmatpush1.bf16.msra.mxu0 0
    %1575 = vmatprep.subr.bf16.mxu0 0
    %1576 = vmatpush1.bf16.msra.mxu0 0
    %1577 = vmatprep.subr.bf16.mxu0 0
    %1578 = vmatpush1.bf16.msra.mxu0 0
    %1579 = vmatprep.subr.bf16.mxu0 0
    %1580 = vmatpush1.bf16.msra.mxu0 0
    %1581 = vmatprep.subr.bf16.mxu0 0
    %1582 = vmatpush1.bf16.msra.mxu0 0
    %1583 = vmatprep.subr.bf16.mxu0 0
    %1584 = vmatpush1.bf16.msra.mxu0 0
    %1585 = vmatprep.subr.bf16.mxu0 0
    %1586 = vmatpush1.bf16.msra.mxu0 0
    %1587 = vmatprep.mubr.bf16.mxu0 0
    %1588 = vmatmul.mubr.bf16.gmra.mrb[0].mxu0 %v1550
    %v1589 = vpop.f32.mrb[0].mxu0
    %v1590 = vadd.f32 0.0, %v1589
    %v1591 = vpop.f32.mrb[0].mxu0
    %v1592 = vpop.f32.mrb[0].mxu0
    %v1593 = vpop.f32.mrb[0].mxu0
    %1594 = vdwg.mxu0
    %v1595 = vadd.f32 %v1438, %v1590
    %1596 = vst.msk [vmem:[#allocation2 + $0x8] sm:$0xff] %vm132, %v1595
    %v1597 = vunpack.c.l.bf16 %v98
    %v1598 = vunpack.c.l.bf16 %v99
    %v1599 = vld [vmem:[#allocation2] sm:$0xff]
    %v1600 = vld [vmem:[#allocation2 + $0x8] sm:$0xff]
    %v1601 = vadd.f32 %v1597, %v1599
    %v1602 = vadd.f32 %v1598, %v1600
    %v1603 = vld [vmem:[#allocation8] sm:$0x1]
    %v1605 = vlaneseq
    %v1606 = vshrl.u32 %v1605, 7
    %v1607 = vsub.s32 0, %v1606
    %v1608 = vrot.slane %v1603, %v1607
    %v1610 = vadd.f32 %v1601, %v1608
    %v1611 = vadd.f32 %v1602, %v1608
    %v1612 = vld [vmem:[%s10] sm:$0x1]
    %v1613 = vld [vmem:[%s11] sm:$0x1]
    %v1614 = vsel %vm132, %v1610, 0.0
    %1615 = vadd.xlane.f32.xlu0 %v1614
    %v1616 = vpop.xlane.xlu0 %1615
    %v1617 = vsel %vm132, %v1611, 0.0
    %1618 = vadd.xlane.f32.xlu0 %v1617
    %v1619 = vpop.xlane.xlu0 %1618
    %v1620 = vrcp.pop 32.0
    %v1621 = vmul.f32 %v1616, %v1620
    %v1622 = vmul.f32 %v1619, %v1620
    %v1623 = vsub.f32 %v1610, %v1621
    %v1624 = vsub.f32 %v1611, %v1622
    %v1625 = vmul.f32 %v1623, %v1623
    %v1626 = vmul.f32 %v1624, %v1624
    %v1627 = vsel %vm132, %v1625, 0.0
    %1628 = vadd.xlane.f32.xlu0 %v1627
    %v1629 = vpop.xlane.xlu0 %1628
    %v1630 = vsel %vm132, %v1626, 0.0
    %1631 = vadd.xlane.f32.xlu0 %v1630
    %v1632 = vpop.xlane.xlu0 %1631
    %v1633 = vmul.f32 %v1629, %v1620
    %v1634 = vmul.f32 %v1632, %v1620
    %v1635 = vadd.f32 %v1633, 1e-05
    %v1636 = vadd.f32 %v1634, 1e-05
    %v1637 = vrsqrt.pop %v1635
    %v1638 = vrsqrt.pop %v1636
    %v1639 = vmul.f32 %v1623, %v1637
    %v1640 = vmul.f32 %v1624, %v1638
    %v1642 = vlaneseq
    %v1643 = vshrl.u32 %v1642, 7
    %v1644 = vsub.s32 0, %v1643
    %v1645 = vrot.slane %v1612, %v1644
    %v1647 = vmul.f32 %v1639, %v1645
    %v1648 = vmul.f32 %v1640, %v1645
    %v1650 = vlaneseq
    %v1651 = vshrl.u32 %v1650, 7
    %v1652 = vsub.s32 0, %v1651
    %v1653 = vrot.slane %v1613, %v1652
    %v1655 = vadd.f32 %v1647, %v1653
    %v1656 = vadd.f32 %v1648, %v1653
    %v1657 = vpack.c.bf16 %v1656, %v1655
    %v1658 = vld [vmem:[%s14] sm:$0xf]
    %v1659 = vld [vmem:[%s14 + $0x4] sm:$0xf]
    %v1660 = vld [vmem:[%s14 + $0x8] sm:$0xf]
    %v1661 = vld [vmem:[%s14 + $0xc] sm:$0xf]
    %v1662 = vld [vmem:[%s15] sm:$0x1]
    %v1664 = vlaneseq
    %v1665 = vshrl.u32 %v1664, 7
    %v1666 = vsub.s32 0, %v1665
    %v1667 = vrot.slane %v1662, %v1666
    %v1673 = vunpack.c.l.b16 %v1658
    %v1674 = vunpack.c.l.b16 %v1659
    %v1675 = vunpack.c.l.b16 %v1660
    %v1676 = vunpack.c.l.b16 %v1661
    %v1677 = vpack.c.b16 %v1674, %v1673
    %v1678 = vpack.c.b16 %v1676, %v1675
    %v1682 = vsel %vm132, %v1657, 0
    %1684 = vmatprep.subr.bf16.mxu0 0
    %1685 = vmatpush1.bf16.msra.mxu0 %v1677
    %1686 = vmatprep.subr.bf16.mxu0 0
    %1687 = vmatpush1.bf16.msra.mxu0 %v1678
    %1688 = vmatprep.subr.bf16.mxu0 0
    %1689 = vmatpush1.bf16.msra.mxu0 0
    %1690 = vmatprep.subr.bf16.mxu0 0
    %1691 = vmatpush1.bf16.msra.mxu0 0
    %1692 = vmatprep.subr.bf16.mxu0 0
    %1693 = vmatpush1.bf16.msra.mxu0 0
    %1694 = vmatprep.subr.bf16.mxu0 0
    %1695 = vmatpush1.bf16.msra.mxu0 0
    %1696 = vmatprep.subr.bf16.mxu0 0
    %1697 = vmatpush1.bf16.msra.mxu0 0
    %1698 = vmatprep.subr.bf16.mxu0 0
    %1699 = vmatpush1.bf16.msra.mxu0 0
    %1700 = vmatprep.subr.bf16.mxu0 0
    %1701 = vmatpush1.bf16.msra.mxu0 0
    %1702 = vmatprep.subr.bf16.mxu0 0
    %1703 = vmatpush1.bf16.msra.mxu0 0
    %1704 = vmatprep.subr.bf16.mxu0 0
    %1705 = vmatpush1.bf16.msra.mxu0 0
    %1706 = vmatprep.subr.bf16.mxu0 0
    %1707 = vmatpush1.bf16.msra.mxu0 0
    %1708 = vmatprep.subr.bf16.mxu0 0
    %1709 = vmatpush1.bf16.msra.mxu0 0
    %1710 = vmatprep.subr.bf16.mxu0 0
    %1711 = vmatpush1.bf16.msra.mxu0 0
    %1712 = vmatprep.subr.bf16.mxu0 0
    %1713 = vmatpush1.bf16.msra.mxu0 0
    %1714 = vmatprep.subr.bf16.mxu0 0
    %1715 = vmatpush1.bf16.msra.mxu0 0
    %1716 = vmatprep.mubr.bf16.mxu0 0
    %1717 = vmatmul.mubr.bf16.gmra.mrb[0].mxu0 %v1682
    %v1718 = vpop.f32.mrb[0].mxu0
    %v1719 = vadd.f32 %v1667, %v1718
    %v1720 = vpop.f32.mrb[0].mxu0
    %v1721 = vpop.f32.mrb[0].mxu0
    %v1722 = vadd.f32 %v1667, %v1721
    %v1723 = vpop.f32.mrb[0].mxu0
    %1724 = vdwg.mxu0
    %v1725 = vmul.f32 %v1719, 0.5
    %v1726 = vmul.f32 %v1722, 0.5
    %v1727 = vmul.f32 %v1719, 0.70710677
    %v1728 = vmul.f32 %v1722, 0.70710677
    %v1729 = verf.f32.pop %v1727
    %v1730 = verf.f32.pop %v1728
    %v1731 = vadd.f32 %v1729, 1.0
    %v1732 = vadd.f32 %v1730, 1.0
    %v1733 = vmul.f32 %v1725, %v1731
    %v1734 = vmul.f32 %v1726, %v1732
    %v1735 = vpack.c.bf16 %v1734, %v1733
    %v1736 = vld [vmem:[%s16] sm:$0xf]
    %v1737 = vld [vmem:[%s16 + $0x4] sm:$0xf]
    %v1738 = vld [vmem:[%s16 + $0x8] sm:$0xf]
    %v1739 = vld [vmem:[%s16 + $0xc] sm:$0xf]
    %v1740 = vld [vmem:[%s16 + $0x10] sm:$0xf]
    %v1741 = vld [vmem:[%s16 + $0x14] sm:$0xf]
    %v1742 = vld [vmem:[%s16 + $0x18] sm:$0xf]
    %v1743 = vld [vmem:[%s16 + $0x1c] sm:$0xf]
    %v1744 = vld [vmem:[%s16 + $0x20] sm:$0xf]
    %v1745 = vld [vmem:[%s16 + $0x24] sm:$0xf]
    %v1746 = vld [vmem:[%s16 + $0x28] sm:$0xf]
    %v1747 = vld [vmem:[%s16 + $0x2c] sm:$0xf]
    %v1748 = vld [vmem:[%s16 + $0x30] sm:$0xf]
    %v1749 = vld [vmem:[%s16 + $0x34] sm:$0xf]
    %v1750 = vld [vmem:[%s16 + $0x38] sm:$0xf]
    %v1751 = vld [vmem:[%s16 + $0x3c] sm:$0xf]
    %v1752 = vld [vmem:[%s17] sm:$0x1]
    %v1754 = vlaneseq
    %v1755 = vshrl.u32 %v1754, 7
    %v1756 = vsub.s32 0, %v1755
    %v1757 = vrot.slane %v1752, %v1756
    %v1775 = vunpack.c.l.b16 %v1736
    %v1776 = vunpack.c.l.b16 %v1737
    %v1777 = vunpack.c.l.b16 %v1738
    %v1778 = vunpack.c.l.b16 %v1739
    %v1779 = vunpack.c.l.b16 %v1740
    %v1780 = vunpack.c.l.b16 %v1741
    %v1781 = vunpack.c.l.b16 %v1742
    %v1782 = vunpack.c.l.b16 %v1743
    %v1783 = vunpack.c.l.b16 %v1744
    %v1784 = vunpack.c.l.b16 %v1745
    %v1785 = vunpack.c.l.b16 %v1746
    %v1786 = vunpack.c.l.b16 %v1747
    %v1787 = vunpack.c.l.b16 %v1748
    %v1788 = vunpack.c.l.b16 %v1749
    %v1789 = vunpack.c.l.b16 %v1750
    %v1790 = vunpack.c.l.b16 %v1751
    %v1791 = vpack.c.b16 %v1776, %v1775
    %v1792 = vpack.c.b16 %v1778, %v1777
    %v1793 = vpack.c.b16 %v1780, %v1779
    %v1794 = vpack.c.b16 %v1782, %v1781
    %v1795 = vpack.c.b16 %v1784, %v1783
    %v1796 = vpack.c.b16 %v1786, %v1785
    %v1797 = vpack.c.b16 %v1788, %v1787
    %v1798 = vpack.c.b16 %v1790, %v1789
    %1807 = vmatprep.subr.bf16.mxu0 0
    %1808 = vmatpush1.bf16.msra.mxu0 %v1791
    %1809 = vmatprep.subr.bf16.mxu0 0
    %1810 = vmatpush1.bf16.msra.mxu0 %v1792
    %1811 = vmatprep.subr.bf16.mxu0 0
    %1812 = vmatpush1.bf16.msra.mxu0 %v1793
    %1813 = vmatprep.subr.bf16.mxu0 0
    %1814 = vmatpush1.bf16.msra.mxu0 %v1794
    %1815 = vmatprep.subr.bf16.mxu0 0
    %1816 = vmatpush1.bf16.msra.mxu0 %v1795
    %1817 = vmatprep.subr.bf16.mxu0 0
    %1818 = vmatpush1.bf16.msra.mxu0 %v1796
    %1819 = vmatprep.subr.bf16.mxu0 0
    %1820 = vmatpush1.bf16.msra.mxu0 %v1797
    %1821 = vmatprep.subr.bf16.mxu0 0
    %1822 = vmatpush1.bf16.msra.mxu0 %v1798
    %1823 = vmatprep.subr.bf16.mxu0 0
    %1824 = vmatpush1.bf16.msra.mxu0 0
    %1825 = vmatprep.subr.bf16.mxu0 0
    %1826 = vmatpush1.bf16.msra.mxu0 0
    %1827 = vmatprep.subr.bf16.mxu0 0
    %1828 = vmatpush1.bf16.msra.mxu0 0
    %1829 = vmatprep.subr.bf16.mxu0 0
    %1830 = vmatpush1.bf16.msra.mxu0 0
    %1831 = vmatprep.subr.bf16.mxu0 0
    %1832 = vmatpush1.bf16.msra.mxu0 0
    %1833 = vmatprep.subr.bf16.mxu0 0
    %1834 = vmatpush1.bf16.msra.mxu0 0
    %1835 = vmatprep.subr.bf16.mxu0 0
    %1836 = vmatpush1.bf16.msra.mxu0 0
    %1837 = vmatprep.subr.bf16.mxu0 0
    %1838 = vmatpush1.bf16.msra.mxu0 0
    %1839 = vmatprep.mubr.bf16.mxu0 0
    %1840 = vmatmul.mubr.bf16.gmra.mrb[0].mxu0 %v1735
    %v1841 = vpop.f32.mrb[0].mxu0
    %v1842 = vadd.f32 %v1757, %v1841
    %v1843 = vpop.f32.mrb[0].mxu0
    %v1844 = vpop.f32.mrb[0].mxu0
    %v1845 = vadd.f32 %v1757, %v1844
    %v1846 = vpop.f32.mrb[0].mxu0
    %1847 = vdwg.mxu0
    %v1848 = vadd.f32 %v1655, %v1842
    %v1849 = vadd.f32 %v1656, %v1845
    %v1850 = vld [vmem:[%s12] sm:$0x1]
    %v1851 = vld [vmem:[%s13] sm:$0x1]
    %v1852 = vsel %vm132, %v1848, 0.0
    %1853 = vadd.xlane.f32.xlu0 %v1852
    %v1854 = vpop.xlane.xlu0 %1853
    %v1855 = vsel %vm132, %v1849, 0.0
    %1856 = vadd.xlane.f32.xlu0 %v1855
    %v1857 = vpop.xlane.xlu0 %1856
    %v1858 = vmul.f32 %v1854, %v1620
    %v1859 = vmul.f32 %v1857, %v1620
    %v1860 = vsub.f32 %v1848, %v1858
    %v1861 = vsub.f32 %v1849, %v1859
    %v1862 = vmul.f32 %v1860, %v1860
    %v1863 = vmul.f32 %v1861, %v1861
    %v1864 = vsel %vm132, %v1862, 0.0
    %1865 = vadd.xlane.f32.xlu0 %v1864
    %v1866 = vpop.xlane.xlu0 %1865
    %v1867 = vsel %vm132, %v1863, 0.0
    %1868 = vadd.xlane.f32.xlu0 %v1867
    %v1869 = vpop.xlane.xlu0 %1868
    %v1870 = vmul.f32 %v1866, %v1620
    %v1871 = vmul.f32 %v1869, %v1620
    %v1872 = vadd.f32 %v1870, 1e-05
    %v1873 = vadd.f32 %v1871, 1e-05
    %v1874 = vrsqrt.pop %v1872
    %v1875 = vrsqrt.pop %v1873
    %v1876 = vmul.f32 %v1860, %v1874
    %v1877 = vmul.f32 %v1861, %v1875
    %v1879 = vlaneseq
    %v1880 = vshrl.u32 %v1879, 7
    %v1881 = vsub.s32 0, %v1880
    %v1882 = vrot.slane %v1850, %v1881
    %v1884 = vmul.f32 %v1876, %v1882
    %v1885 = vmul.f32 %v1877, %v1882
    %v1887 = vlaneseq
    %v1888 = vshrl.u32 %v1887, 7
    %v1889 = vsub.s32 0, %v1888
    %v1890 = vrot.slane %v1851, %v1889
    %v1892 = vadd.f32 %v1884, %v1890
    %v1893 = vadd.f32 %v1885, %v1890
    %v1894 = vpack.c.bf16 %v1893, %v1892
    %v1896 = vunpack.c.l.b16 %v1894
    %v1897 = vunpack.c.h.b16 %v1894
    %v1898 = vpack.c.b16 %v1896, %v1896
    %v1899 = vpack.c.b16 %v1897, %v1897
    %vm1902 = vcmask 257024
    %1903 = vst.msk [vmem:[#allocation9] sm:$0xf] %vm1902, %v1898
    %1904 = vst.msk [vmem:[#allocation9 + $0x4] sm:$0xf] %vm1902, %v1899
    // Predicated region
    $region86: #{tpu_custom_call.1} parent=1 // pred_check
      _
    $region87: #{tpu_custom_call.1} parent=1 // pred_check_branch
      %1906 = sbr.rel (0) target = $region89
    $region88: #{tpu_custom_call.1} parent=1 // pred_region
      %s1908 = ssub.s32 128, 128
      %1909 = vsyncadd [#allocation5], %s1908
      %s1910 = sshll.u32 [#allocation9], 4
      %s1911 = int_to_ptr.vmem [resolvable:$true] %s1910
      %1916 = dma.vmem_to_hbm [thread:$0]  %s1911, 128, %s18, [#allocation5], 64, 64, 4
    $region89: #{tpu_custom_call.1} parent=1 // pred_fallthru
      _
    // Predicated region
    $region90: #{tpu_custom_call.1} parent=1 // pred_check
      _
    $region91: #{tpu_custom_call.1} parent=1 // pred_check_branch
      %1918 = sbr.rel (0) target = $region93
    $region92: #{tpu_custom_call.1} parent=1 // pred_region
      %1919 = dma.done [#allocation5], 128
    $region93: #{tpu_custom_call.1} parent=1 // pred_fallthru
      _
    %1920 = vsyncpa [#allocation4], 1
    %1921 = vsyncpa [#allocation7], 1
    %1922 = vsyncpa [#allocation5], 1

</llo_original>
